<compile_context>
chip_gen: v7x
topology: tpu7x:2x2x1
jax: 0.10.0
libtpu: 0.0.40
codegen_flags: <defaults>
</compile_context>

<pallas_src>
import jax
import jax.numpy as jnp
import numpy as np
from jax.experimental import pallas as pl
from jax.experimental.pallas import tpu as pltpu


# --------------------------------------------------------------------------
# Wrapper-side parameter transform: fold kw taps + Cin->Cout contraction of a
# 3x3 conv into per-kh banded matrices:
#   bw[kh, wi*Ci+ci, wo*Co+co] = w[kh, wi-wo+1, ci, co]   (0 outside the band)
# This also encodes the zero-padding along W.
# --------------------------------------------------------------------------
def _make_banded_weights(w_hwio, w_dim):
    kh, kw, ci, co = w_hwio.shape
    wi = jnp.arange(w_dim)[None, :, None]
    wo = jnp.arange(w_dim)[None, None, :]
    kk = jnp.arange(kw)[:, None, None]
    band = (wi == wo + kk - 1).astype(w_hwio.dtype)           # (3, W, W)
    bw = jnp.einsum('hkio,kab->haibo', w_hwio, band)          # (3, W, Ci, W, Co)
    return bw.reshape(kh, w_dim * ci, w_dim * co)


# --------------------------------------------------------------------------
# Fused DoubleConv kernel (single grid step, everything VMEM/vreg resident).
# --------------------------------------------------------------------------
def _make_kernel(N, H, W, Cin, Cout):
    WCi, WCo = W * Cin, W * Cout
    R = N * H
    inv_count = 1.0 / float(N * H * W)
    eps = 1e-5

    def bn_relu(y, g_t, be_t, gsum):
        # y: (R, WCo) lane-dense. Per-channel batch stats: sublane row-sum,
        # then a 0/1 matmul that both reduces over the W lane groups and
        # re-broadcasts the per-channel result across all lanes.
        s = jnp.sum(y, axis=0, keepdims=True)                  # (1, WCo)
        ss = jnp.sum(y * y, axis=0, keepdims=True)             # (1, WCo)
        ch_sum = jnp.dot(s, gsum, preferred_element_type=jnp.float32)
        ch_sq = jnp.dot(ss, gsum, preferred_element_type=jnp.float32)
        mean = ch_sum * inv_count
        var = ch_sq * inv_count - mean * mean                  # biased variance
        scale = g_t * jax.lax.rsqrt(var + eps)
        shift = be_t - mean * scale
        return jnp.maximum(y * scale + shift, 0.0)

    def kernel(xp_ref, bw1_ref, b1_ref, g1_ref, be1_ref,
               bw2_ref, b2_ref, g2_ref, be2_ref, gsum_ref,
               o_ref, apad_ref):
        # xp_ref  : (N, H+2, W*Cin)   H-halo pre-padded, lane-packed input
        # bw1_ref : (3, W*Cin, W*Cout)   per-kh banded conv1 weights
        # bw2_ref : (3, W*Cout, W*Cout)  per-kh banded conv2 weights
        # b/g/be  : (1, W*Cout)          per-channel params tiled over W lanes
        # gsum_ref: (W*Cout, W*Cout)     0/1 channel-group sum matrix
        # o_ref   : (N*H, W*Cout)        lane-dense output slab
        # apad_ref: (N, H+2, W*Cout)     VMEM scratch for the intermediate
        gsum = gsum_ref[...]

        # ---- Conv1: 3 banded MXU matmuls over the kh taps (vreg accumulator)
        y1 = jnp.dot(xp_ref[:, 0:H, :].reshape(R, WCi), bw1_ref[0],
                     preferred_element_type=jnp.float32)
        for kh in (1, 2):
            y1 = y1 + jnp.dot(xp_ref[:, kh:kh + H, :].reshape(R, WCi),
                              bw1_ref[kh], preferred_element_type=jnp.float32)
        y1 = y1 + b1_ref[...]

        # ---- BN1 (train-mode batch stats) + ReLU ---------------------------
        a1 = bn_relu(y1, g1_ref[...], be1_ref[...], gsum)

        # ---- Intermediate stays in VMEM; zero only the 1-row H halo --------
        zrow = jnp.zeros((N, 1, WCo), jnp.float32)
        apad_ref[:, 0:1, :] = zrow
        apad_ref[:, H + 1:H + 2, :] = zrow
        apad_ref[:, 1:H + 1, :] = a1.reshape(N, H, WCo)

        # ---- Conv2 ----------------------------------------------------------
        y2 = jnp.dot(apad_ref[:, 0:H, :].reshape(R, WCo), bw2_ref[0],
                     preferred_element_type=jnp.float32)
        for kh in (1, 2):
            y2 = y2 + jnp.dot(apad_ref[:, kh:kh + H, :].reshape(R, WCo),
                              bw2_ref[kh], preferred_element_type=jnp.float32)
        y2 = y2 + b2_ref[...]

        # ---- BN2 + ReLU -> single dense (N*H, W*Cout) store -----------------
        o_ref[...] = bn_relu(y2, g2_ref[...], be2_ref[...],
                             gsum).astype(o_ref.dtype)

    return kernel


def double_conv_pallas(x_nchw, params):
    x = jnp.transpose(x_nchw, (0, 2, 3, 1)).astype(jnp.float32)   # NCHW -> NHWC
    N, H, W, Cin = x.shape
    Cout = params["w1"].shape[-1]
    WCi, WCo = W * Cin, W * Cout

    # Pack W,C onto the lane axis and pad the H halo once (tiny; fuses with the
    # layout transpose into one small HBM copy).
    xp = jnp.pad(x.reshape(N, H, WCi), ((0, 0), (1, 1), (0, 0)))

    bw1 = _make_banded_weights(params["w1"], W)            # (3, WCi, WCo)
    bw2 = _make_banded_weights(params["w2"], W)            # (3, WCo, WCo)

    tile_c = lambda v: jnp.tile(v.reshape(1, Cout), (1, W))        # (1, WCo)
    lane = jnp.arange(WCo)
    gsum = (lane[:, None] % Cout == lane[None, :] % Cout).astype(jnp.float32)

    kernel = _make_kernel(N, H, W, Cin, Cout)
    full = lambda shape: pl.BlockSpec(shape, lambda i, _s=shape: (0,) * len(_s))

    out2d = pl.pallas_call(
        kernel,
        out_shape=jax.ShapeDtypeStruct((N * H, WCo), jnp.float32),
        grid_spec=pltpu.PrefetchScalarGridSpec(
            num_scalar_prefetch=0,
            grid=(1,),
            in_specs=[
                full((N, H + 2, WCi)),
                full((3, WCi, WCo)),
                full((1, WCo)), full((1, WCo)), full((1, WCo)),
                full((3, WCo, WCo)),
                full((1, WCo)), full((1, WCo)), full((1, WCo)),
                full((WCo, WCo)),
            ],
            out_specs=full((N * H, WCo)),
            scratch_shapes=[pltpu.VMEM((N, H + 2, WCo), jnp.float32)],
        ),
        compiler_params=pltpu.CompilerParams(
            dimension_semantics=("arbitrary",),
            vmem_limit_bytes=32 * 1024 * 1024,
        ),
    )(xp, bw1, tile_c(params["b1"]), tile_c(params["g1"]), tile_c(params["be1"]),
      bw2, tile_c(params["b2"]), tile_c(params["g2"]), tile_c(params["be2"]),
      gsum)

    out = out2d.reshape(N, H, W, Cout)
    return jnp.transpose(out, (0, 3, 1, 2))                 # NHWC -> NCHW


# --------------------------------------------------------------------------
# Pure-JAX reference (matches torch: Conv2d(pad=1) -> BN(train) -> ReLU, x2).
# Note: BN uses training-mode batch stats (same as nn.BatchNorm2d in train
# mode); running_mean/running_var side-effects are not modeled.
# --------------------------------------------------------------------------
def double_conv_ref(x_nchw, params):
    def conv(x, w_hwio, b):
        y = jax.lax.conv_general_dilated(
            x, w_hwio, window_strides=(1, 1), padding="SAME",
            dimension_numbers=("NCHW", "HWIO", "NCHW"))
        return y + b[None, :, None, None]

    def bn_relu_ref(x, g, be):
        mean = jnp.mean(x, axis=(0, 2, 3), keepdims=True)
        var = jnp.mean((x - mean) ** 2, axis=(0, 2, 3), keepdims=True)
        y = (x - mean) * jax.lax.rsqrt(var + 1e-5)
        y = y * g[None, :, None, None] + be[None, :, None, None]
        return jnp.maximum(y, 0.0)

    x = conv(x_nchw, params["w1"], params["b1"])
    x = bn_relu_ref(x, params["g1"], params["be1"])
    x = conv(x, params["w2"], params["b2"])
    x = bn_relu_ref(x, params["g2"], params["be2"])
    return x


if __name__ == "__main__":
    in_channels, out_channels = 4, 8
    N, H, W = 2, 16, 16

    key = jax.random.PRNGKey(0)
    k_x, k_w1, k_b1, k_w2, k_b2 = jax.random.split(key, 5)

    x = jax.random.normal(k_x, (N, in_channels, H, W), dtype=jnp.float32)

    params = {
        # Conv weights in HWIO (kh, kw, cin, cout)
        "w1": 0.1 * jax.random.normal(k_w1, (3, 3, in_channels, out_channels),
                                      dtype=jnp.float32),
        "b1": 0.1 * jax.random.normal(k_b1, (out_channels,), dtype=jnp.float32),
        "g1": jnp.ones((out_channels,), jnp.float32),
        "be1": jnp.zeros((out_channels,), jnp.float32),
        "w2": 0.1 * jax.random.normal(k_w2, (3, 3, out_channels, out_channels),
                                      dtype=jnp.float32),
        "b2": 0.1 * jax.random.normal(k_b2, (out_channels,), dtype=jnp.float32),
        "g2": jnp.ones((out_channels,), jnp.float32),
        "be2": jnp.zeros((out_channels,), jnp.float32),
    }

    out = jax.block_until_ready(double_conv_pallas(x, params))
    ref = jax.block_until_ready(double_conv_ref(x, params))

    assert out.shape == (N, out_channels, H, W), out.shape
    assert np.allclose(np.asarray(out), np.asarray(ref), rtol=1e-4, atol=1e-4), (
        "mismatch vs reference")

    print("KERNEL_OK")
</pallas_src>

<mosaic_0001>
module attributes {stable_mosaic.version = 11 : i64} {
  func.func @kernel(%arg0: i32, %arg1: memref<2x18x64xf32, #tpu.memory_space<vmem>>, %arg2: memref<3x64x128xf32, #tpu.memory_space<vmem>>, %arg3: memref<1x128xf32, #tpu.memory_space<vmem>>, %arg4: memref<1x128xf32, #tpu.memory_space<vmem>>, %arg5: memref<1x128xf32, #tpu.memory_space<vmem>>, %arg6: memref<3x128x128xf32, #tpu.memory_space<vmem>>, %arg7: memref<1x128xf32, #tpu.memory_space<vmem>>, %arg8: memref<1x128xf32, #tpu.memory_space<vmem>>, %arg9: memref<1x128xf32, #tpu.memory_space<vmem>>, %arg10: memref<128x128xf32, #tpu.memory_space<vmem>>, %arg11: memref<32x128xf32, #tpu.memory_space<vmem>>, %arg12: memref<2x18x128xf32, #tpu.memory_space<vmem>>) attributes {dimension_semantics = [#tpu.dimension_semantics<arbitrary>], iteration_bounds = array<i64: 1>, scalar_prefetch = 0 : i64, scratch_operands = 1 : i64, tpu.core_type = #tpu.core_type<tc>, window_params = [{pipeline_mode = #tpu.pipeline_mode<synchronous>, transform_indices = @transform_0, window_bounds = array<i64: 2, 18, 64>}, {pipeline_mode = #tpu.pipeline_mode<synchronous>, transform_indices = @transform_1, window_bounds = array<i64: 3, 64, 128>}, {pipeline_mode = #tpu.pipeline_mode<synchronous>, transform_indices = @transform_2, window_bounds = array<i64: 1, 128>}, {pipeline_mode = #tpu.pipeline_mode<synchronous>, transform_indices = @transform_3, window_bounds = array<i64: 1, 128>}, {pipeline_mode = #tpu.pipeline_mode<synchronous>, transform_indices = @transform_4, window_bounds = array<i64: 1, 128>}, {pipeline_mode = #tpu.pipeline_mode<synchronous>, transform_indices = @transform_5, window_bounds = array<i64: 3, 128, 128>}, {pipeline_mode = #tpu.pipeline_mode<synchronous>, transform_indices = @transform_6, window_bounds = array<i64: 1, 128>}, {pipeline_mode = #tpu.pipeline_mode<synchronous>, transform_indices = @transform_7, window_bounds = array<i64: 1, 128>}, {pipeline_mode = #tpu.pipeline_mode<synchronous>, transform_indices = @transform_8, window_bounds = array<i64: 1, 128>}, {pipeline_mode = #tpu.pipeline_mode<synchronous>, transform_indices = @transform_9, window_bounds = array<i64: 128, 128>}, {pipeline_mode = #tpu.pipeline_mode<synchronous>, transform_indices = @transform_10, window_bounds = array<i64: 32, 128>}]} {
    %c0 = arith.constant 0 : index
    %c0_0 = arith.constant 0 : index
    %0 = vector.load %arg10[%c0, %c0_0] : memref<128x128xf32, #tpu.memory_space<vmem>>, vector<128x128xf32>
    %c0_1 = arith.constant 0 : index
    %c0_2 = arith.constant 0 : index
    %c0_3 = arith.constant 0 : index
    %1 = vector.load %arg1[%c0_1, %c0_2, %c0_3] : memref<2x18x64xf32, #tpu.memory_space<vmem>>, vector<2x16x64xf32>
    %2 = vector.shape_cast %1 : vector<2x16x64xf32> to vector<32x64xf32>
    %c0_4 = arith.constant 0 : index
    %c0_5 = arith.constant 0 : index
    %c0_6 = arith.constant 0 : index
    %3 = vector.load %arg2[%c0_4, %c0_5, %c0_6] : memref<3x64x128xf32, #tpu.memory_space<vmem>>, vector<1x64x128xf32>
    %4 = vector.shape_cast %3 : vector<1x64x128xf32> to vector<64x128xf32>
    %cst = arith.constant dense<0.000000e+00> : vector<32x128xf32>
    %5 = tpu.matmul %2, %4, %cst {dimension_numbers = #tpu.dot_dimension_numbers<[1], [0], [0], [1], [0, 0, 1, 1], [], []>} : vector<32x64xf32>, vector<64x128xf32>, vector<32x128xf32> -> vector<32x128xf32>
    %c0_7 = arith.constant 0 : index
    %c1 = arith.constant 1 : index
    %c0_8 = arith.constant 0 : index
    %6 = vector.load %arg1[%c0_7, %c1, %c0_8] : memref<2x18x64xf32, #tpu.memory_space<vmem>>, vector<2x16x64xf32>
    %7 = vector.shape_cast %6 : vector<2x16x64xf32> to vector<32x64xf32>
    %c1_9 = arith.constant 1 : index
    %c0_10 = arith.constant 0 : index
    %c0_11 = arith.constant 0 : index
    %8 = vector.load %arg2[%c1_9, %c0_10, %c0_11] : memref<3x64x128xf32, #tpu.memory_space<vmem>>, vector<1x64x128xf32>
    %9 = vector.shape_cast %8 : vector<1x64x128xf32> to vector<64x128xf32>
    %cst_12 = arith.constant dense<0.000000e+00> : vector<32x128xf32>
    %10 = tpu.matmul %7, %9, %cst_12 {dimension_numbers = #tpu.dot_dimension_numbers<[1], [0], [0], [1], [0, 0, 1, 1], [], []>} : vector<32x64xf32>, vector<64x128xf32>, vector<32x128xf32> -> vector<32x128xf32>
    %11 = arith.addf %5, %10 : vector<32x128xf32>
    %c0_13 = arith.constant 0 : index
    %c2 = arith.constant 2 : index
    %c0_14 = arith.constant 0 : index
    %12 = vector.load %arg1[%c0_13, %c2, %c0_14] : memref<2x18x64xf32, #tpu.memory_space<vmem>>, vector<2x16x64xf32>
    %13 = vector.shape_cast %12 : vector<2x16x64xf32> to vector<32x64xf32>
    %c2_15 = arith.constant 2 : index
    %c0_16 = arith.constant 0 : index
    %c0_17 = arith.constant 0 : index
    %14 = vector.load %arg2[%c2_15, %c0_16, %c0_17] : memref<3x64x128xf32, #tpu.memory_space<vmem>>, vector<1x64x128xf32>
    %15 = vector.shape_cast %14 : vector<1x64x128xf32> to vector<64x128xf32>
    %cst_18 = arith.constant dense<0.000000e+00> : vector<32x128xf32>
    %16 = tpu.matmul %13, %15, %cst_18 {dimension_numbers = #tpu.dot_dimension_numbers<[1], [0], [0], [1], [0, 0, 1, 1], [], []>} : vector<32x64xf32>, vector<64x128xf32>, vector<32x128xf32> -> vector<32x128xf32>
    %17 = arith.addf %11, %16 : vector<32x128xf32>
    %c0_19 = arith.constant 0 : index
    %c0_20 = arith.constant 0 : index
    %18 = vector.load %arg3[%c0_19, %c0_20] : memref<1x128xf32, #tpu.memory_space<vmem>>, vector<1x128xf32>
    %19 = vector.broadcast %18 : vector<1x128xf32> to vector<32x128xf32>
    %20 = arith.addf %17, %19 : vector<32x128xf32>
    %c0_21 = arith.constant 0 : index
    %c0_22 = arith.constant 0 : index
    %21 = vector.load %arg4[%c0_21, %c0_22] : memref<1x128xf32, #tpu.memory_space<vmem>>, vector<1x128xf32>
    %c0_23 = arith.constant 0 : index
    %c0_24 = arith.constant 0 : index
    %22 = vector.load %arg5[%c0_23, %c0_24] : memref<1x128xf32, #tpu.memory_space<vmem>>, vector<1x128xf32>
    %cst_25 = arith.constant dense<0.000000e+00> : vector<128xf32>
    %23 = vector.multi_reduction <add>, %20, %cst_25 [0] : vector<32x128xf32> to vector<128xf32>
    %24 = vector.shape_cast %23 : vector<128xf32> to vector<1x128xf32>
    %25 = arith.mulf %20, %20 : vector<32x128xf32>
    %cst_26 = arith.constant dense<0.000000e+00> : vector<128xf32>
    %26 = vector.multi_reduction <add>, %25, %cst_26 [0] : vector<32x128xf32> to vector<128xf32>
    %27 = vector.shape_cast %26 : vector<128xf32> to vector<1x128xf32>
    %cst_27 = arith.constant dense<0.000000e+00> : vector<1x128xf32>
    %28 = tpu.matmul %24, %0, %cst_27 {dimension_numbers = #tpu.dot_dimension_numbers<[1], [0], [0], [1], [0, 0, 1, 1], [], []>} : vector<1x128xf32>, vector<128x128xf32>, vector<1x128xf32> -> vector<1x128xf32>
    %cst_28 = arith.constant dense<0.000000e+00> : vector<1x128xf32>
    %29 = tpu.matmul %27, %0, %cst_28 {dimension_numbers = #tpu.dot_dimension_numbers<[1], [0], [0], [1], [0, 0, 1, 1], [], []>} : vector<1x128xf32>, vector<128x128xf32>, vector<1x128xf32> -> vector<1x128xf32>
    %cst_29 = arith.constant 0.001953125 : f32
    %30 = vector.broadcast %cst_29 : f32 to vector<1x128xf32>
    %31 = arith.mulf %28, %30 : vector<1x128xf32>
    %cst_30 = arith.constant 0.001953125 : f32
    %32 = vector.broadcast %cst_30 : f32 to vector<1x128xf32>
    %33 = arith.mulf %29, %32 : vector<1x128xf32>
    %34 = arith.mulf %31, %31 : vector<1x128xf32>
    %35 = arith.subf %33, %34 : vector<1x128xf32>
    %cst_31 = arith.constant 9.99999974E-6 : f32
    %36 = vector.broadcast %cst_31 : f32 to vector<1x128xf32>
    %37 = arith.addf %35, %36 : vector<1x128xf32>
    %38 = math.rsqrt %37 : vector<1x128xf32>
    %39 = arith.mulf %21, %38 : vector<1x128xf32>
    %40 = arith.mulf %31, %39 : vector<1x128xf32>
    %41 = arith.subf %22, %40 : vector<1x128xf32>
    %42 = vector.broadcast %39 : vector<1x128xf32> to vector<32x128xf32>
    %43 = arith.mulf %20, %42 : vector<32x128xf32>
    %44 = vector.broadcast %41 : vector<1x128xf32> to vector<32x128xf32>
    %45 = arith.addf %43, %44 : vector<32x128xf32>
    %cst_32 = arith.constant 0.000000e+00 : f32
    %46 = vector.broadcast %cst_32 : f32 to vector<32x128xf32>
    %47 = arith.maximumf %45, %46 : vector<32x128xf32>
    %cst_33 = arith.constant 0.000000e+00 : f32
    %48 = vector.broadcast %cst_33 : f32 to vector<2x1x128xf32>
    %c0_34 = arith.constant 0 : index
    %c0_35 = arith.constant 0 : index
    %c0_36 = arith.constant 0 : index
    %49 = vector.load %arg12[%c0_34, %c0_35, %c0_36] : memref<2x18x128xf32, #tpu.memory_space<vmem>>, vector<2x1x128xf32>
    tpu.vector_store %arg12[%c0_34, %c0_35, %c0_36], %48 {strides = array<i32>} : memref<2x18x128xf32, #tpu.memory_space<vmem>>, vector<2x1x128xf32>,
    %c0_37 = arith.constant 0 : index
    %c17 = arith.constant 17 : index
    %c0_38 = arith.constant 0 : index
    %50 = vector.load %arg12[%c0_37, %c17, %c0_38] : memref<2x18x128xf32, #tpu.memory_space<vmem>>, vector<2x1x128xf32>
    tpu.vector_store %arg12[%c0_37, %c17, %c0_38], %48 {strides = array<i32>} : memref<2x18x128xf32, #tpu.memory_space<vmem>>, vector<2x1x128xf32>,
    %51 = vector.shape_cast %47 : vector<32x128xf32> to vector<2x16x128xf32>
    %c0_39 = arith.constant 0 : index
    %c1_40 = arith.constant 1 : index
    %c0_41 = arith.constant 0 : index
    %52 = vector.load %arg12[%c0_39, %c1_40, %c0_41] : memref<2x18x128xf32, #tpu.memory_space<vmem>>, vector<2x16x128xf32>
    tpu.vector_store %arg12[%c0_39, %c1_40, %c0_41], %51 {strides = array<i32>} : memref<2x18x128xf32, #tpu.memory_space<vmem>>, vector<2x16x128xf32>,
    %c0_42 = arith.constant 0 : index
    %c0_43 = arith.constant 0 : index
    %c0_44 = arith.constant 0 : index
    %53 = vector.load %arg12[%c0_42, %c0_43, %c0_44] : memref<2x18x128xf32, #tpu.memory_space<vmem>>, vector<2x16x128xf32>
    %54 = vector.shape_cast %53 : vector<2x16x128xf32> to vector<32x128xf32>
    %c0_45 = arith.constant 0 : index
    %c0_46 = arith.constant 0 : index
    %c0_47 = arith.constant 0 : index
    %55 = vector.load %arg6[%c0_45, %c0_46, %c0_47] : memref<3x128x128xf32, #tpu.memory_space<vmem>>, vector<1x128x128xf32>
    %56 = vector.shape_cast %55 : vector<1x128x128xf32> to vector<128x128xf32>
    %cst_48 = arith.constant dense<0.000000e+00> : vector<32x128xf32>
    %57 = tpu.matmul %54, %56, %cst_48 {dimension_numbers = #tpu.dot_dimension_numbers<[1], [0], [0], [1], [0, 0, 1, 1], [], []>} : vector<32x128xf32>, vector<128x128xf32>, vector<32x128xf32> -> vector<32x128xf32>
    %c0_49 = arith.constant 0 : index
    %c1_50 = arith.constant 1 : index
    %c0_51 = arith.constant 0 : index
    %58 = vector.load %arg12[%c0_49, %c1_50, %c0_51] : memref<2x18x128xf32, #tpu.memory_space<vmem>>, vector<2x16x128xf32>
    %59 = vector.shape_cast %58 : vector<2x16x128xf32> to vector<32x128xf32>
    %c1_52 = arith.constant 1 : index
    %c0_53 = arith.constant 0 : index
    %c0_54 = arith.constant 0 : index
    %60 = vector.load %arg6[%c1_52, %c0_53, %c0_54] : memref<3x128x128xf32, #tpu.memory_space<vmem>>, vector<1x128x128xf32>
    %61 = vector.shape_cast %60 : vector<1x128x128xf32> to vector<128x128xf32>
    %cst_55 = arith.constant dense<0.000000e+00> : vector<32x128xf32>
    %62 = tpu.matmul %59, %61, %cst_55 {dimension_numbers = #tpu.dot_dimension_numbers<[1], [0], [0], [1], [0, 0, 1, 1], [], []>} : vector<32x128xf32>, vector<128x128xf32>, vector<32x128xf32> -> vector<32x128xf32>
    %63 = arith.addf %57, %62 : vector<32x128xf32>
    %c0_56 = arith.constant 0 : index
    %c2_57 = arith.constant 2 : index
    %c0_58 = arith.constant 0 : index
    %64 = vector.load %arg12[%c0_56, %c2_57, %c0_58] : memref<2x18x128xf32, #tpu.memory_space<vmem>>, vector<2x16x128xf32>
    %65 = vector.shape_cast %64 : vector<2x16x128xf32> to vector<32x128xf32>
    %c2_59 = arith.constant 2 : index
    %c0_60 = arith.constant 0 : index
    %c0_61 = arith.constant 0 : index
    %66 = vector.load %arg6[%c2_59, %c0_60, %c0_61] : memref<3x128x128xf32, #tpu.memory_space<vmem>>, vector<1x128x128xf32>
    %67 = vector.shape_cast %66 : vector<1x128x128xf32> to vector<128x128xf32>
    %cst_62 = arith.constant dense<0.000000e+00> : vector<32x128xf32>
    %68 = tpu.matmul %65, %67, %cst_62 {dimension_numbers = #tpu.dot_dimension_numbers<[1], [0], [0], [1], [0, 0, 1, 1], [], []>} : vector<32x128xf32>, vector<128x128xf32>, vector<32x128xf32> -> vector<32x128xf32>
    %69 = arith.addf %63, %68 : vector<32x128xf32>
    %c0_63 = arith.constant 0 : index
    %c0_64 = arith.constant 0 : index
    %70 = vector.load %arg7[%c0_63, %c0_64] : memref<1x128xf32, #tpu.memory_space<vmem>>, vector<1x128xf32>
    %71 = vector.broadcast %70 : vector<1x128xf32> to vector<32x128xf32>
    %72 = arith.addf %69, %71 : vector<32x128xf32>
    %c0_65 = arith.constant 0 : index
    %c0_66 = arith.constant 0 : index
    %73 = vector.load %arg8[%c0_65, %c0_66] : memref<1x128xf32, #tpu.memory_space<vmem>>, vector<1x128xf32>
    %c0_67 = arith.constant 0 : index
    %c0_68 = arith.constant 0 : index
    %74 = vector.load %arg9[%c0_67, %c0_68] : memref<1x128xf32, #tpu.memory_space<vmem>>, vector<1x128xf32>
    %cst_69 = arith.constant dense<0.000000e+00> : vector<128xf32>
    %75 = vector.multi_reduction <add>, %72, %cst_69 [0] : vector<32x128xf32> to vector<128xf32>
    %76 = vector.shape_cast %75 : vector<128xf32> to vector<1x128xf32>
    %77 = arith.mulf %72, %72 : vector<32x128xf32>
    %cst_70 = arith.constant dense<0.000000e+00> : vector<128xf32>
    %78 = vector.multi_reduction <add>, %77, %cst_70 [0] : vector<32x128xf32> to vector<128xf32>
    %79 = vector.shape_cast %78 : vector<128xf32> to vector<1x128xf32>
    %cst_71 = arith.constant dense<0.000000e+00> : vector<1x128xf32>
    %80 = tpu.matmul %76, %0, %cst_71 {dimension_numbers = #tpu.dot_dimension_numbers<[1], [0], [0], [1], [0, 0, 1, 1], [], []>} : vector<1x128xf32>, vector<128x128xf32>, vector<1x128xf32> -> vector<1x128xf32>
    %cst_72 = arith.constant dense<0.000000e+00> : vector<1x128xf32>
    %81 = tpu.matmul %79, %0, %cst_72 {dimension_numbers = #tpu.dot_dimension_numbers<[1], [0], [0], [1], [0, 0, 1, 1], [], []>} : vector<1x128xf32>, vector<128x128xf32>, vector<1x128xf32> -> vector<1x128xf32>
    %cst_73 = arith.constant 0.001953125 : f32
    %82 = vector.broadcast %cst_73 : f32 to vector<1x128xf32>
    %83 = arith.mulf %80, %82 : vector<1x128xf32>
    %cst_74 = arith.constant 0.001953125 : f32
    %84 = vector.broadcast %cst_74 : f32 to vector<1x128xf32>
    %85 = arith.mulf %81, %84 : vector<1x128xf32>
    %86 = arith.mulf %83, %83 : vector<1x128xf32>
    %87 = arith.subf %85, %86 : vector<1x128xf32>
    %cst_75 = arith.constant 9.99999974E-6 : f32
    %88 = vector.broadcast %cst_75 : f32 to vector<1x128xf32>
    %89 = arith.addf %87, %88 : vector<1x128xf32>
    %90 = math.rsqrt %89 : vector<1x128xf32>
    %91 = arith.mulf %73, %90 : vector<1x128xf32>
    %92 = arith.mulf %83, %91 : vector<1x128xf32>
    %93 = arith.subf %74, %92 : vector<1x128xf32>
    %94 = vector.broadcast %91 : vector<1x128xf32> to vector<32x128xf32>
    %95 = arith.mulf %72, %94 : vector<32x128xf32>
    %96 = vector.broadcast %93 : vector<1x128xf32> to vector<32x128xf32>
    %97 = arith.addf %95, %96 : vector<32x128xf32>
    %cst_76 = arith.constant 0.000000e+00 : f32
    %98 = vector.broadcast %cst_76 : f32 to vector<32x128xf32>
    %99 = arith.maximumf %97, %98 : vector<32x128xf32>
    %c0_77 = arith.constant 0 : index
    %c0_78 = arith.constant 0 : index
    %100 = vector.load %arg11[%c0_77, %c0_78] : memref<32x128xf32, #tpu.memory_space<vmem>>, vector<32x128xf32>
    tpu.vector_store %arg11[%c0_77, %c0_78], %99 {strides = array<i32>} : memref<32x128xf32, #tpu.memory_space<vmem>>, vector<32x128xf32>,
    return
  }
  func.func @transform_0(%arg0: i32) -> (i32, i32, i32) {
    %c0_i32 = arith.constant 0 : i32
    %c0_i32_0 = arith.constant 0 : i32
    %c0_i32_1 = arith.constant 0 : i32
    %c0_i32_2 = arith.constant 0 : i32
    return %c0_i32, %c0_i32_0, %c0_i32_1 : i32, i32, i32
  }
  func.func @transform_1(%arg0: i32) -> (i32, i32, i32) {
    %c0_i32 = arith.constant 0 : i32
    %c0_i32_0 = arith.constant 0 : i32
    %c0_i32_1 = arith.constant 0 : i32
    %c0_i32_2 = arith.constant 0 : i32
    return %c0_i32, %c0_i32_0, %c0_i32_1 : i32, i32, i32
  }
  func.func @transform_2(%arg0: i32) -> (i32, i32) {
    %c0_i32 = arith.constant 0 : i32
    %c0_i32_0 = arith.constant 0 : i32
    %c0_i32_1 = arith.constant 0 : i32
    return %c0_i32, %c0_i32_0 : i32, i32
  }
  func.func @transform_3(%arg0: i32) -> (i32, i32) {
    %c0_i32 = arith.constant 0 : i32
    %c0_i32_0 = arith.constant 0 : i32
    %c0_i32_1 = arith.constant 0 : i32
    return %c0_i32, %c0_i32_0 : i32, i32
  }
  func.func @transform_4(%arg0: i32) -> (i32, i32) {
    %c0_i32 = arith.constant 0 : i32
    %c0_i32_0 = arith.constant 0 : i32
    %c0_i32_1 = arith.constant 0 : i32
    return %c0_i32, %c0_i32_0 : i32, i32
  }
  func.func @transform_5(%arg0: i32) -> (i32, i32, i32) {
    %c0_i32 = arith.constant 0 : i32
    %c0_i32_0 = arith.constant 0 : i32
    %c0_i32_1 = arith.constant 0 : i32
    %c0_i32_2 = arith.constant 0 : i32
    return %c0_i32, %c0_i32_0, %c0_i32_1 : i32, i32, i32
  }
  func.func @transform_6(%arg0: i32) -> (i32, i32) {
    %c0_i32 = arith.constant 0 : i32
    %c0_i32_0 = arith.constant 0 : i32
    %c0_i32_1 = arith.constant 0 : i32
    return %c0_i32, %c0_i32_0 : i32, i32
  }
  func.func @transform_7(%arg0: i32) -> (i32, i32) {
    %c0_i32 = arith.constant 0 : i32
    %c0_i32_0 = arith.constant 0 : i32
    %c0_i32_1 = arith.constant 0 : i32
    return %c0_i32, %c0_i32_0 : i32, i32
  }
  func.func @transform_8(%arg0: i32) -> (i32, i32) {
    %c0_i32 = arith.constant 0 : i32
    %c0_i32_0 = arith.constant 0 : i32
    %c0_i32_1 = arith.constant 0 : i32
    return %c0_i32, %c0_i32_0 : i32, i32
  }
  func.func @transform_9(%arg0: i32) -> (i32, i32) {
    %c0_i32 = arith.constant 0 : i32
    %c0_i32_0 = arith.constant 0 : i32
    %c0_i32_1 = arith.constant 0 : i32
    return %c0_i32, %c0_i32_0 : i32, i32
  }
  func.func @transform_10(%arg0: i32) -> (i32, i32) {
    %c0_i32 = arith.constant 0 : i32
    %c0_i32_0 = arith.constant 0 : i32
    %c0_i32_1 = arith.constant 0 : i32
    return %c0_i32, %c0_i32_0 : i32, i32
  }
}

</mosaic_0001>

<llo_original>
// kernel: tpu_custom_call.1
$region0: #{tpu_custom_call.1}
  #allocation0 [shape = 'u32[]', space=smem, size = 0x4, offset = 0x4, fixed_abs, tag = 'smem constant byte address 0x4 - core index']
  #allocation1 [shape = 'u32[144,128]{1,0:T(1,128)}', space=vmem, size = 0x12000, scoped, tag = 'internal scratch']
  #allocation2 [shape = 'f32[2,18,128]{2,1,0:T(8,128)}', space=vmem, size = 0x6000, scoped, tag = 'scratch operand']
  %s0 = inlined_call_operand.vmem [shape: f32[2,18,64], index: 0, kind: input, shape index: {}]
  %s1 = inlined_call_operand.hbm [shape: f32[3,64,128], index: 1, kind: input, shape index: {}]
  %s2 = inlined_call_operand.vmem [shape: f32[1,128], index: 2, kind: input, shape index: {}]
  %s3 = inlined_call_operand.vmem [shape: f32[1,128], index: 3, kind: input, shape index: {}]
  %s4 = inlined_call_operand.vmem [shape: f32[1,128], index: 4, kind: input, shape index: {}]
  %s5 = inlined_call_operand.hbm [shape: f32[3,128,128], index: 5, kind: input, shape index: {}]
  %s6 = inlined_call_operand.vmem [shape: f32[1,128], index: 6, kind: input, shape index: {}]
  %s7 = inlined_call_operand.vmem [shape: f32[1,128], index: 7, kind: input, shape index: {}]
  %s8 = inlined_call_operand.vmem [shape: f32[1,128], index: 8, kind: input, shape index: {}]
  %s9 = inlined_call_operand.hbm [shape: f32[128,128], index: 9, kind: input, shape index: {}]
  %s10 = inlined_call_operand.hbm [shape: f32[32,128], index: 10, kind: output, shape index: {}]
  %s11 = sld [smem:[#allocation0]]
  $region62: #{tpu_custom_call.1} parent=0
    _
  %s13 = ssub.s32 1, %s11
  %s14 = scalar_select 0, %s13, %s11
  $region1: #{tpu_custom_call.1} parent=0
    #allocation3 [shape = 'u8[98304]{0}', space=vmem, size = 0x18000, scoped, tag = 'input window, operand 1, single buffered']
    #allocation4 [shape = 's32[1]{0}', space=sflag, size = 0x4, scoped, tag = 'scoped memory for tpu_custom_call.1']
    #allocation5 [shape = 's32[1]{0}', space=sflag, size = 0x4, scoped, tag = 'scoped memory for tpu_custom_call.1']
    #allocation6 [shape = 'u8[196608]{0}', space=vmem, size = 0x30000, scoped, tag = 'input window, operand 5, single buffered']
    #allocation7 [shape = 's32[1]{0}', space=sflag, size = 0x4, scoped, tag = 'scoped memory for tpu_custom_call.1']
    #allocation8 [shape = 'u8[65536]{0}', space=vmem, size = 0x10000, scoped, tag = 'input window, operand 9, single buffered']
    #allocation9 [shape = 'u8[16384]{0}', space=vmem, size = 0x4000, scoped, tag = 'output window, operand 0, single buffered']
    %15 = vsyncpa [#allocation4], 0
    %16 = vsyncpa [#allocation7], 0
    %17 = vsyncpa [#allocation5], 0
    // Predicated region
    $region2: #{tpu_custom_call.1} parent=1 // pred_check
      _
    $region3: #{tpu_custom_call.1} parent=1 // pred_check_branch
      %19 = sbr.rel (0) target = $region5
    $region4: #{tpu_custom_call.1} parent=1 // pred_region
      _
    $region5: #{tpu_custom_call.1} parent=1 // pred_fallthru
      _
    // Predicated region
    $region6: #{tpu_custom_call.1} parent=1 // pred_check
      _
    $region7: #{tpu_custom_call.1} parent=1 // pred_check_branch
      %21 = sbr.rel (0) target = $region9
    $region8: #{tpu_custom_call.1} parent=1 // pred_region
      %s23 = ssub.s32 3072, 3072
      %24 = vsyncadd [#allocation4], %s23
      %s25 = sshll.u32 [#allocation3], 4
      %s26 = int_to_ptr.vmem [resolvable:$true] %s25
      %31 = dma.hbm_to_vmem [thread:$0]  %s1, 3072, %s26, [#allocation4], 128, 128, 8
    $region9: #{tpu_custom_call.1} parent=1 // pred_fallthru
      _
    // Predicated region
    $region10: #{tpu_custom_call.1} parent=1 // pred_check
      _
    $region11: #{tpu_custom_call.1} parent=1 // pred_check_branch
      %33 = sbr.rel (0) target = $region13
    $region12: #{tpu_custom_call.1} parent=1 // pred_region
      _
    $region13: #{tpu_custom_call.1} parent=1 // pred_fallthru
      _
    // Predicated region
    $region14: #{tpu_custom_call.1} parent=1 // pred_check
      _
    $region15: #{tpu_custom_call.1} parent=1 // pred_check_branch
      %35 = sbr.rel (0) target = $region17
    $region16: #{tpu_custom_call.1} parent=1 // pred_region
      _
    $region17: #{tpu_custom_call.1} parent=1 // pred_fallthru
      _
    // Predicated region
    $region18: #{tpu_custom_call.1} parent=1 // pred_check
      _
    $region19: #{tpu_custom_call.1} parent=1 // pred_check_branch
      %37 = sbr.rel (0) target = $region21
    $region20: #{tpu_custom_call.1} parent=1 // pred_region
      _
    $region21: #{tpu_custom_call.1} parent=1 // pred_fallthru
      _
    // Predicated region
    $region22: #{tpu_custom_call.1} parent=1 // pred_check
      _
    $region23: #{tpu_custom_call.1} parent=1 // pred_check_branch
      %39 = sbr.rel (0) target = $region25
    $region24: #{tpu_custom_call.1} parent=1 // pred_region
      %s41 = ssub.s32 6144, 6144
      %42 = vsyncadd [#allocation7], %s41
      %s43 = sshll.u32 [#allocation6], 4
      %s44 = int_to_ptr.vmem [resolvable:$true] %s43
      %49 = dma.hbm_to_vmem [thread:$0]  %s5, 6144, %s44, [#allocation7], 128, 128, 8
    $region25: #{tpu_custom_call.1} parent=1 // pred_fallthru
      _
    // Predicated region
    $region26: #{tpu_custom_call.1} parent=1 // pred_check
      _
    $region27: #{tpu_custom_call.1} parent=1 // pred_check_branch
      %51 = sbr.rel (0) target = $region29
    $region28: #{tpu_custom_call.1} parent=1 // pred_region
      _
    $region29: #{tpu_custom_call.1} parent=1 // pred_fallthru
      _
    // Predicated region
    $region30: #{tpu_custom_call.1} parent=1 // pred_check
      _
    $region31: #{tpu_custom_call.1} parent=1 // pred_check_branch
      %53 = sbr.rel (0) target = $region33
    $region32: #{tpu_custom_call.1} parent=1 // pred_region
      _
    $region33: #{tpu_custom_call.1} parent=1 // pred_fallthru
      _
    // Predicated region
    $region34: #{tpu_custom_call.1} parent=1 // pred_check
      _
    $region35: #{tpu_custom_call.1} parent=1 // pred_check_branch
      %55 = sbr.rel (0) target = $region37
    $region36: #{tpu_custom_call.1} parent=1 // pred_region
      _
    $region37: #{tpu_custom_call.1} parent=1 // pred_fallthru
      _
    // Predicated region
    $region38: #{tpu_custom_call.1} parent=1 // pred_check
      _
    $region39: #{tpu_custom_call.1} parent=1 // pred_check_branch
      %57 = sbr.rel (0) target = $region41
    $region40: #{tpu_custom_call.1} parent=1 // pred_region
      %s59 = ssub.s32 2048, 2048
      %60 = vsyncadd [#allocation7], %s59
      %s61 = sshll.u32 [#allocation8], 4
      %s62 = int_to_ptr.vmem [resolvable:$true] %s61
      %67 = dma.hbm_to_vmem [thread:$0]  %s9, 2048, %s62, [#allocation7], 128, 128, 8
    $region41: #{tpu_custom_call.1} parent=1 // pred_fallthru
      _
    // Predicated region
    $region42: #{tpu_custom_call.1} parent=1 // pred_check
      _
    $region43: #{tpu_custom_call.1} parent=1 // pred_check_branch
      %69 = sbr.rel (0) target = $region45
    $region44: #{tpu_custom_call.1} parent=1 // pred_region
      %70 = dma.done [#allocation4], 3072
    $region45: #{tpu_custom_call.1} parent=1 // pred_fallthru
      _
    // Predicated region
    $region46: #{tpu_custom_call.1} parent=1 // pred_check
      _
    $region47: #{tpu_custom_call.1} parent=1 // pred_check_branch
      %72 = sbr.rel (0) target = $region49
    $region48: #{tpu_custom_call.1} parent=1 // pred_region
      %73 = dma.done [#allocation7], 6144
    $region49: #{tpu_custom_call.1} parent=1 // pred_fallthru
      _
    // Predicated region
    $region50: #{tpu_custom_call.1} parent=1 // pred_check
      _
    $region51: #{tpu_custom_call.1} parent=1 // pred_check_branch
      %75 = sbr.rel (0) target = $region53
    $region52: #{tpu_custom_call.1} parent=1 // pred_region
      %76 = dma.done [#allocation7], 2048
    $region53: #{tpu_custom_call.1} parent=1 // pred_fallthru
      _
    %v77 = vld [vmem:[#allocation8] sm:$0xff]
    %v78 = vld [vmem:[#allocation8 + $0x8] sm:$0xff]
    %v79 = vld [vmem:[#allocation8 + $0x10] sm:$0xff]
    %v80 = vld [vmem:[#allocation8 + $0x18] sm:$0xff]
    %v81 = vld [vmem:[#allocation8 + $0x20] sm:$0xff]
    %v82 = vld [vmem:[#allocation8 + $0x28] sm:$0xff]
    %v83 = vld [vmem:[#allocation8 + $0x30] sm:$0xff]
    %v84 = vld [vmem:[#allocation8 + $0x38] sm:$0xff]
    %v85 = vld [vmem:[#allocation8 + $0x40] sm:$0xff]
    %v86 = vld [vmem:[#allocation8 + $0x48] sm:$0xff]
    %v87 = vld [vmem:[#allocation8 + $0x50] sm:$0xff]
    %v88 = vld [vmem:[#allocation8 + $0x58] sm:$0xff]
    %v89 = vld [vmem:[#allocation8 + $0x60] sm:$0xff]
    %v90 = vld [vmem:[#allocation8 + $0x68] sm:$0xff]
    %v91 = vld [vmem:[#allocation8 + $0x70] sm:$0xff]
    %v92 = vld [vmem:[#allocation8 + $0x78] sm:$0xff]
    %v93 = vld [vmem:[%s0] sm:$0xff]
    %v94 = vld [vmem:[%s0 + $0x8] sm:$0xff]
    %v95 = vld [vmem:[%s0 + $0x18] sm:$0xff]
    %v96 = vld [vmem:[%s0 + $0x20] sm:$0xff]
    %v97 = vld [vmem:[#allocation3] sm:$0xff]
    %v98 = vld [vmem:[#allocation3 + $0x8] sm:$0xff]
    %v99 = vld [vmem:[#allocation3 + $0x10] sm:$0xff]
    %v100 = vld [vmem:[#allocation3 + $0x18] sm:$0xff]
    %v101 = vld [vmem:[#allocation3 + $0x20] sm:$0xff]
    %v102 = vld [vmem:[#allocation3 + $0x28] sm:$0xff]
    %v103 = vld [vmem:[#allocation3 + $0x30] sm:$0xff]
    %v104 = vld [vmem:[#allocation3 + $0x38] sm:$0xff]
    %v105 = vld [vmem:[%s0 + $0x1] sm:$0xff]
    %v106 = vld [vmem:[%s0 + $0x9] sm:$0xff]
    %v107 = vld [vmem:[%s0 + $0x19] sm:$0xff]
    %v108 = vld [vmem:[%s0 + $0x21] sm:$0xff]
    %s109 = scalar_lea.vmem [#allocation3], 64
    %v110 = vld [vmem:[%s109] sm:$0xff]
    %v111 = vld [vmem:[%s109 + $0x8] sm:$0xff]
    %v112 = vld [vmem:[%s109 + $0x10] sm:$0xff]
    %v113 = vld [vmem:[%s109 + $0x18] sm:$0xff]
    %v114 = vld [vmem:[%s109 + $0x20] sm:$0xff]
    %v115 = vld [vmem:[%s109 + $0x28] sm:$0xff]
    %v116 = vld [vmem:[%s109 + $0x30] sm:$0xff]
    %v117 = vld [vmem:[%s109 + $0x38] sm:$0xff]
    %vm118 = vcmask 523264
    %v120 = vsel %vm118, %v105, 0
    %v123 = vsel %vm118, %v106, 0
    %v126 = vsel %vm118, %v107, 0
    %v129 = vsel %vm118, %v108, 0
    %131 = vmatprep.subr.mxu0 0.0
    %132 = vmatpush1.msra.mxu0 %v110
    %133 = vmatprep.subr.mxu0 0.0
    %134 = vmatpush1.msra.mxu0 %v111
    %135 = vmatprep.subr.mxu0 0.0
    %136 = vmatpush1.msra.mxu0 %v112
    %137 = vmatprep.subr.mxu0 0.0
    %138 = vmatpush1.msra.mxu0 %v113
    %139 = vmatprep.subr.mxu0 0.0
    %140 = vmatpush1.msra.mxu0 %v114
    %141 = vmatprep.subr.mxu0 0.0
    %142 = vmatpush1.msra.mxu0 %v115
    %143 = vmatprep.subr.mxu0 0.0
    %144 = vmatpush1.msra.mxu0 %v116
    %145 = vmatprep.subr.mxu0 0.0
    %146 = vmatpush1.msra.mxu0 %v117
    %147 = vmatprep.subr.mxu0 0.0
    %148 = vmatpush1.msra.mxu0 0.0
    %149 = vmatprep.subr.mxu0 0.0
    %150 = vmatpush1.msra.mxu0 0.0
    %151 = vmatprep.subr.mxu0 0.0
    %152 = vmatpush1.msra.mxu0 0.0
    %153 = vmatprep.subr.mxu0 0.0
    %154 = vmatpush1.msra.mxu0 0.0
    %155 = vmatprep.subr.mxu0 0.0
    %156 = vmatpush1.msra.mxu0 0.0
    %157 = vmatprep.subr.mxu0 0.0
    %158 = vmatpush1.msra.mxu0 0.0
    %159 = vmatprep.subr.mxu0 0.0
    %160 = vmatpush1.msra.mxu0 0.0
    %161 = vmatprep.subr.mxu0 0.0
    %162 = vmatpush1.msra.mxu0 0.0
    %163 = vmatprep.subr.mxu0 0.0
    %164 = vmatpush1.msra.mxu0 0.0
    %165 = vmatprep.subr.mxu0 0.0
    %166 = vmatpush1.msra.mxu0 0.0
    %167 = vmatprep.subr.mxu0 0.0
    %168 = vmatpush1.msra.mxu0 0.0
    %169 = vmatprep.subr.mxu0 0.0
    %170 = vmatpush1.msra.mxu0 0.0
    %171 = vmatprep.subr.mxu0 0.0
    %172 = vmatpush1.msra.mxu0 0.0
    %173 = vmatprep.subr.mxu0 0.0
    %174 = vmatpush1.msra.mxu0 0.0
    %175 = vmatprep.subr.mxu0 0.0
    %176 = vmatpush1.msra.mxu0 0.0
    %177 = vmatprep.subr.mxu0 0.0
    %178 = vmatpush1.msra.mxu0 0.0
    %179 = vmatprep.subr.mxu0 0.0
    %180 = vmatpush1.msra.mxu0 0.0
    %181 = vmatprep.subr.mxu0 0.0
    %182 = vmatpush1.msra.mxu0 0.0
    %183 = vmatprep.subr.mxu0 0.0
    %184 = vmatpush1.msra.mxu0 0.0
    %185 = vmatprep.subr.mxu0 0.0
    %186 = vmatpush1.msra.mxu0 0.0
    %187 = vmatprep.subr.mxu0 0.0
    %188 = vmatpush1.msra.mxu0 0.0
    %189 = vmatprep.subr.mxu0 0.0
    %190 = vmatpush1.msra.mxu0 0.0
    %191 = vmatprep.subr.mxu0 0.0
    %192 = vmatpush1.msra.mxu0 0.0
    %193 = vmatprep.subr.mxu0 0.0
    %194 = vmatpush1.msra.mxu0 0.0
    %195 = vmatprep.mubr.f32.mxu0 0.0
    %196 = vmatmul.mubr.f32.gmra.mrb[0].mxu0 %v120
    %v197 = vpop.f32.mrb[0].mxu0
    %v198 = vadd.f32 0.0, %v197
    %v199 = vpop.f32.mrb[0].mxu0
    %200 = vmatprep.mubr.f32.mxu0 0.0
    %201 = vmatmul.mubr.f32.gmra.mrb[0].mxu0 %v123
    %v202 = vpop.f32.mrb[0].mxu0
    %v203 = vadd.f32 0.0, %v202
    %v204 = vpop.f32.mrb[0].mxu0
    %205 = vmatprep.mubr.f32.mxu0 0.0
    %206 = vmatmul.mubr.f32.gmra.mrb[0].mxu0 %v126
    %v207 = vpop.f32.mrb[0].mxu0
    %v208 = vadd.f32 0.0, %v207
    %v209 = vpop.f32.mrb[0].mxu0
    %210 = vmatprep.mubr.f32.mxu0 0.0
    %211 = vmatmul.mubr.f32.gmra.mrb[0].mxu0 %v129
    %v212 = vpop.f32.mrb[0].mxu0
    %v213 = vadd.f32 0.0, %v212
    %v214 = vpop.f32.mrb[0].mxu0
    %215 = vdwg.mxu0
    %v217 = vsel %vm118, %v93, 0
    %v220 = vsel %vm118, %v94, 0
    %v223 = vsel %vm118, %v95, 0
    %v226 = vsel %vm118, %v96, 0
    %228 = vmatprep.subr.mxu0 0.0
    %229 = vmatpush1.msra.mxu0 %v97
    %230 = vmatprep.subr.mxu0 0.0
    %231 = vmatpush1.msra.mxu0 %v98
    %232 = vmatprep.subr.mxu0 0.0
    %233 = vmatpush1.msra.mxu0 %v99
    %234 = vmatprep.subr.mxu0 0.0
    %235 = vmatpush1.msra.mxu0 %v100
    %236 = vmatprep.subr.mxu0 0.0
    %237 = vmatpush1.msra.mxu0 %v101
    %238 = vmatprep.subr.mxu0 0.0
    %239 = vmatpush1.msra.mxu0 %v102
    %240 = vmatprep.subr.mxu0 0.0
    %241 = vmatpush1.msra.mxu0 %v103
    %242 = vmatprep.subr.mxu0 0.0
    %243 = vmatpush1.msra.mxu0 %v104
    %244 = vmatprep.subr.mxu0 0.0
    %245 = vmatpush1.msra.mxu0 0.0
    %246 = vmatprep.subr.mxu0 0.0
    %247 = vmatpush1.msra.mxu0 0.0
    %248 = vmatprep.subr.mxu0 0.0
    %249 = vmatpush1.msra.mxu0 0.0
    %250 = vmatprep.subr.mxu0 0.0
    %251 = vmatpush1.msra.mxu0 0.0
    %252 = vmatprep.subr.mxu0 0.0
    %253 = vmatpush1.msra.mxu0 0.0
    %254 = vmatprep.subr.mxu0 0.0
    %255 = vmatpush1.msra.mxu0 0.0
    %256 = vmatprep.subr.mxu0 0.0
    %257 = vmatpush1.msra.mxu0 0.0
    %258 = vmatprep.subr.mxu0 0.0
    %259 = vmatpush1.msra.mxu0 0.0
    %260 = vmatprep.subr.mxu0 0.0
    %261 = vmatpush1.msra.mxu0 0.0
    %262 = vmatprep.subr.mxu0 0.0
    %263 = vmatpush1.msra.mxu0 0.0
    %264 = vmatprep.subr.mxu0 0.0
    %265 = vmatpush1.msra.mxu0 0.0
    %266 = vmatprep.subr.mxu0 0.0
    %267 = vmatpush1.msra.mxu0 0.0
    %268 = vmatprep.subr.mxu0 0.0
    %269 = vmatpush1.msra.mxu0 0.0
    %270 = vmatprep.subr.mxu0 0.0
    %271 = vmatpush1.msra.mxu0 0.0
    %272 = vmatprep.subr.mxu0 0.0
    %273 = vmatpush1.msra.mxu0 0.0
    %274 = vmatprep.subr.mxu0 0.0
    %275 = vmatpush1.msra.mxu0 0.0
    %276 = vmatprep.subr.mxu0 0.0
    %277 = vmatpush1.msra.mxu0 0.0
    %278 = vmatprep.subr.mxu0 0.0
    %279 = vmatpush1.msra.mxu0 0.0
    %280 = vmatprep.subr.mxu0 0.0
    %281 = vmatpush1.msra.mxu0 0.0
    %282 = vmatprep.subr.mxu0 0.0
    %283 = vmatpush1.msra.mxu0 0.0
    %284 = vmatprep.subr.mxu0 0.0
    %285 = vmatpush1.msra.mxu0 0.0
    %286 = vmatprep.subr.mxu0 0.0
    %287 = vmatpush1.msra.mxu0 0.0
    %288 = vmatprep.subr.mxu0 0.0
    %289 = vmatpush1.msra.mxu0 0.0
    %290 = vmatprep.subr.mxu0 0.0
    %291 = vmatpush1.msra.mxu0 0.0
    %292 = vmatprep.mubr.f32.mxu0 0.0
    %293 = vmatmul.mubr.f32.gmra.mrb[0].mxu0 %v217
    %v294 = vpop.f32.mrb[0].mxu0
    %v295 = vadd.f32 %v198, %v294
    %v296 = vpop.f32.mrb[0].mxu0
    %297 = vmatprep.mubr.f32.mxu0 0.0
    %298 = vmatmul.mubr.f32.gmra.mrb[0].mxu0 %v220
    %v299 = vpop.f32.mrb[0].mxu0
    %v300 = vadd.f32 %v203, %v299
    %v301 = vpop.f32.mrb[0].mxu0
    %302 = vmatprep.mubr.f32.mxu0 0.0
    %303 = vmatmul.mubr.f32.gmra.mrb[0].mxu0 %v223
    %v304 = vpop.f32.mrb[0].mxu0
    %v305 = vadd.f32 %v208, %v304
    %v306 = vpop.f32.mrb[0].mxu0
    %307 = vmatprep.mubr.f32.mxu0 0.0
    %308 = vmatmul.mubr.f32.gmra.mrb[0].mxu0 %v226
    %v309 = vpop.f32.mrb[0].mxu0
    %v310 = vadd.f32 %v213, %v309
    %v311 = vpop.f32.mrb[0].mxu0
    %312 = vdwg.mxu0
    %v313 = vld [vmem:[%s0 + $0x2] sm:$0xff]
    %v314 = vld [vmem:[%s0 + $0xa] sm:$0xff]
    %v315 = vld [vmem:[%s0 + $0x1a] sm:$0xff]
    %v316 = vld [vmem:[%s0 + $0x22] sm:$0xff]
    %s317 = scalar_lea.vmem [#allocation3], 128
    %v318 = vld [vmem:[%s317] sm:$0xff]
    %v319 = vld [vmem:[%s317 + $0x8] sm:$0xff]
    %v320 = vld [vmem:[%s317 + $0x10] sm:$0xff]
    %v321 = vld [vmem:[%s317 + $0x18] sm:$0xff]
    %v322 = vld [vmem:[%s317 + $0x20] sm:$0xff]
    %v323 = vld [vmem:[%s317 + $0x28] sm:$0xff]
    %v324 = vld [vmem:[%s317 + $0x30] sm:$0xff]
    %v325 = vld [vmem:[%s317 + $0x38] sm:$0xff]
    %v327 = vsel %vm118, %v313, 0
    %v330 = vsel %vm118, %v314, 0
    %v333 = vsel %vm118, %v315, 0
    %v336 = vsel %vm118, %v316, 0
    %338 = vmatprep.subr.mxu0 0.0
    %339 = vmatpush1.msra.mxu0 %v318
    %340 = vmatprep.subr.mxu0 0.0
    %341 = vmatpush1.msra.mxu0 %v319
    %342 = vmatprep.subr.mxu0 0.0
    %343 = vmatpush1.msra.mxu0 %v320
    %344 = vmatprep.subr.mxu0 0.0
    %345 = vmatpush1.msra.mxu0 %v321
    %346 = vmatprep.subr.mxu0 0.0
    %347 = vmatpush1.msra.mxu0 %v322
    %348 = vmatprep.subr.mxu0 0.0
    %349 = vmatpush1.msra.mxu0 %v323
    %350 = vmatprep.subr.mxu0 0.0
    %351 = vmatpush1.msra.mxu0 %v324
    %352 = vmatprep.subr.mxu0 0.0
    %353 = vmatpush1.msra.mxu0 %v325
    %354 = vmatprep.subr.mxu0 0.0
    %355 = vmatpush1.msra.mxu0 0.0
    %356 = vmatprep.subr.mxu0 0.0
    %357 = vmatpush1.msra.mxu0 0.0
    %358 = vmatprep.subr.mxu0 0.0
    %359 = vmatpush1.msra.mxu0 0.0
    %360 = vmatprep.subr.mxu0 0.0
    %361 = vmatpush1.msra.mxu0 0.0
    %362 = vmatprep.subr.mxu0 0.0
    %363 = vmatpush1.msra.mxu0 0.0
    %364 = vmatprep.subr.mxu0 0.0
    %365 = vmatpush1.msra.mxu0 0.0
    %366 = vmatprep.subr.mxu0 0.0
    %367 = vmatpush1.msra.mxu0 0.0
    %368 = vmatprep.subr.mxu0 0.0
    %369 = vmatpush1.msra.mxu0 0.0
    %370 = vmatprep.subr.mxu0 0.0
    %371 = vmatpush1.msra.mxu0 0.0
    %372 = vmatprep.subr.mxu0 0.0
    %373 = vmatpush1.msra.mxu0 0.0
    %374 = vmatprep.subr.mxu0 0.0
    %375 = vmatpush1.msra.mxu0 0.0
    %376 = vmatprep.subr.mxu0 0.0
    %377 = vmatpush1.msra.mxu0 0.0
    %378 = vmatprep.subr.mxu0 0.0
    %379 = vmatpush1.msra.mxu0 0.0
    %380 = vmatprep.subr.mxu0 0.0
    %381 = vmatpush1.msra.mxu0 0.0
    %382 = vmatprep.subr.mxu0 0.0
    %383 = vmatpush1.msra.mxu0 0.0
    %384 = vmatprep.subr.mxu0 0.0
    %385 = vmatpush1.msra.mxu0 0.0
    %386 = vmatprep.subr.mxu0 0.0
    %387 = vmatpush1.msra.mxu0 0.0
    %388 = vmatprep.subr.mxu0 0.0
    %389 = vmatpush1.msra.mxu0 0.0
    %390 = vmatprep.subr.mxu0 0.0
    %391 = vmatpush1.msra.mxu0 0.0
    %392 = vmatprep.subr.mxu0 0.0
    %393 = vmatpush1.msra.mxu0 0.0
    %394 = vmatprep.subr.mxu0 0.0
    %395 = vmatpush1.msra.mxu0 0.0
    %396 = vmatprep.subr.mxu0 0.0
    %397 = vmatpush1.msra.mxu0 0.0
    %398 = vmatprep.subr.mxu0 0.0
    %399 = vmatpush1.msra.mxu0 0.0
    %400 = vmatprep.subr.mxu0 0.0
    %401 = vmatpush1.msra.mxu0 0.0
    %402 = vmatprep.mubr.f32.mxu0 0.0
    %403 = vmatmul.mubr.f32.gmra.mrb[0].mxu0 %v327
    %v404 = vpop.f32.mrb[0].mxu0
    %v405 = vadd.f32 0.0, %v404
    %v406 = vpop.f32.mrb[0].mxu0
    %407 = vmatprep.mubr.f32.mxu0 0.0
    %408 = vmatmul.mubr.f32.gmra.mrb[0].mxu0 %v330
    %v409 = vpop.f32.mrb[0].mxu0
    %v410 = vadd.f32 0.0, %v409
    %v411 = vpop.f32.mrb[0].mxu0
    %412 = vmatprep.mubr.f32.mxu0 0.0
    %413 = vmatmul.mubr.f32.gmra.mrb[0].mxu0 %v333
    %v414 = vpop.f32.mrb[0].mxu0
    %v415 = vadd.f32 0.0, %v414
    %v416 = vpop.f32.mrb[0].mxu0
    %417 = vmatprep.mubr.f32.mxu0 0.0
    %418 = vmatmul.mubr.f32.gmra.mrb[0].mxu0 %v336
    %v419 = vpop.f32.mrb[0].mxu0
    %v420 = vadd.f32 0.0, %v419
    %v421 = vpop.f32.mrb[0].mxu0
    %422 = vdwg.mxu0
    %v423 = vadd.f32 %v295, %v405
    %v424 = vadd.f32 %v300, %v410
    %v425 = vadd.f32 %v305, %v415
    %v426 = vadd.f32 %v310, %v420
    %v427 = vld [vmem:[%s2] sm:$0x1]
    %v429 = vlaneseq
    %v430 = vshrl.u32 %v429, 7
    %v431 = vsub.s32 0, %v430
    %v432 = vrot.slane %v427, %v431
    %v434 = vadd.f32 %v423, %v432
    %v435 = vadd.f32 %v424, %v432
    %v436 = vadd.f32 %v425, %v432
    %v437 = vadd.f32 %v426, %v432
    %v438 = vld [vmem:[%s3] sm:$0x1]
    %v439 = vld [vmem:[%s4] sm:$0x1]
    %v440 = vadd.f32 %v434, %v435
    %v441 = vadd.f32 %v440, %v436
    %v442 = vadd.f32 %v441, %v437
    %v443 = vrot.slane %v442, 4
    %v444 = vadd.f32 %v442, %v443
    %v445 = vrot.slane %v444, 2
    %v446 = vadd.f32 %v444, %v445
    %v447 = vrot.slane %v446, 1
    %v448 = vadd.f32 %v446, %v447
    %v449 = vmul.f32 %v434, %v434
    %v450 = vmul.f32 %v435, %v435
    %v451 = vmul.f32 %v436, %v436
    %v452 = vmul.f32 %v437, %v437
    %v453 = vadd.f32 %v449, %v450
    %v454 = vadd.f32 %v453, %v451
    %v455 = vadd.f32 %v454, %v452
    %v456 = vrot.slane %v455, 4
    %v457 = vadd.f32 %v455, %v456
    %v458 = vrot.slane %v457, 2
    %v459 = vadd.f32 %v457, %v458
    %v460 = vrot.slane %v459, 1
    %v461 = vadd.f32 %v459, %v460
    %462 = vmatprep.subr.mxu0 0.0
    %463 = vmatpush1.msra.mxu0 %v77
    %464 = vmatprep.subr.mxu0 0.0
    %465 = vmatpush1.msra.mxu0 %v78
    %466 = vmatprep.subr.mxu0 0.0
    %467 = vmatpush1.msra.mxu0 %v79
    %468 = vmatprep.subr.mxu0 0.0
    %469 = vmatpush1.msra.mxu0 %v80
    %470 = vmatprep.subr.mxu0 0.0
    %471 = vmatpush1.msra.mxu0 %v81
    %472 = vmatprep.subr.mxu0 0.0
    %473 = vmatpush1.msra.mxu0 %v82
    %474 = vmatprep.subr.mxu0 0.0
    %475 = vmatpush1.msra.mxu0 %v83
    %476 = vmatprep.subr.mxu0 0.0
    %477 = vmatpush1.msra.mxu0 %v84
    %478 = vmatprep.subr.mxu0 0.0
    %479 = vmatpush1.msra.mxu0 %v85
    %480 = vmatprep.subr.mxu0 0.0
    %481 = vmatpush1.msra.mxu0 %v86
    %482 = vmatprep.subr.mxu0 0.0
    %483 = vmatpush1.msra.mxu0 %v87
    %484 = vmatprep.subr.mxu0 0.0
    %485 = vmatpush1.msra.mxu0 %v88
    %486 = vmatprep.subr.mxu0 0.0
    %487 = vmatpush1.msra.mxu0 %v89
    %488 = vmatprep.subr.mxu0 0.0
    %489 = vmatpush1.msra.mxu0 %v90
    %490 = vmatprep.subr.mxu0 0.0
    %491 = vmatpush1.msra.mxu0 %v91
    %492 = vmatprep.subr.mxu0 0.0
    %493 = vmatpush1.msra.mxu0 %v92
    %494 = vmatprep.subr.mxu0 0.0
    %495 = vmatpush1.msra.mxu0 0.0
    %496 = vmatprep.subr.mxu0 0.0
    %497 = vmatpush1.msra.mxu0 0.0
    %498 = vmatprep.subr.mxu0 0.0
    %499 = vmatpush1.msra.mxu0 0.0
    %500 = vmatprep.subr.mxu0 0.0
    %501 = vmatpush1.msra.mxu0 0.0
    %502 = vmatprep.subr.mxu0 0.0
    %503 = vmatpush1.msra.mxu0 0.0
    %504 = vmatprep.subr.mxu0 0.0
    %505 = vmatpush1.msra.mxu0 0.0
    %506 = vmatprep.subr.mxu0 0.0
    %507 = vmatpush1.msra.mxu0 0.0
    %508 = vmatprep.subr.mxu0 0.0
    %509 = vmatpush1.msra.mxu0 0.0
    %510 = vmatprep.subr.mxu0 0.0
    %511 = vmatpush1.msra.mxu0 0.0
    %512 = vmatprep.subr.mxu0 0.0
    %513 = vmatpush1.msra.mxu0 0.0
    %514 = vmatprep.subr.mxu0 0.0
    %515 = vmatpush1.msra.mxu0 0.0
    %516 = vmatprep.subr.mxu0 0.0
    %517 = vmatpush1.msra.mxu0 0.0
    %518 = vmatprep.subr.mxu0 0.0
    %519 = vmatpush1.msra.mxu0 0.0
    %520 = vmatprep.subr.mxu0 0.0
    %521 = vmatpush1.msra.mxu0 0.0
    %522 = vmatprep.subr.mxu0 0.0
    %523 = vmatpush1.msra.mxu0 0.0
    %524 = vmatprep.subr.mxu0 0.0
    %525 = vmatpush1.msra.mxu0 0.0
    %526 = vmatprep.mubr.f32.mxu0 0.0
    %527 = vmatmul.mubr.f32.gmra.mrb[0].mxu0 %v448
    %v528 = vpop.f32.mrb[0].mxu0
    %v529 = vadd.f32 0.0, %v528
    %v530 = vpop.f32.mrb[0].mxu0
    %531 = vdwg.mxu0
    %532 = vmatprep.subr.mxu0 0.0
    %533 = vmatpush1.msra.mxu0 %v77
    %534 = vmatprep.subr.mxu0 0.0
    %535 = vmatpush1.msra.mxu0 %v78
    %536 = vmatprep.subr.mxu0 0.0
    %537 = vmatpush1.msra.mxu0 %v79
    %538 = vmatprep.subr.mxu0 0.0
    %539 = vmatpush1.msra.mxu0 %v80
    %540 = vmatprep.subr.mxu0 0.0
    %541 = vmatpush1.msra.mxu0 %v81
    %542 = vmatprep.subr.mxu0 0.0
    %543 = vmatpush1.msra.mxu0 %v82
    %544 = vmatprep.subr.mxu0 0.0
    %545 = vmatpush1.msra.mxu0 %v83
    %546 = vmatprep.subr.mxu0 0.0
    %547 = vmatpush1.msra.mxu0 %v84
    %548 = vmatprep.subr.mxu0 0.0
    %549 = vmatpush1.msra.mxu0 %v85
    %550 = vmatprep.subr.mxu0 0.0
    %551 = vmatpush1.msra.mxu0 %v86
    %552 = vmatprep.subr.mxu0 0.0
    %553 = vmatpush1.msra.mxu0 %v87
    %554 = vmatprep.subr.mxu0 0.0
    %555 = vmatpush1.msra.mxu0 %v88
    %556 = vmatprep.subr.mxu0 0.0
    %557 = vmatpush1.msra.mxu0 %v89
    %558 = vmatprep.subr.mxu0 0.0
    %559 = vmatpush1.msra.mxu0 %v90
    %560 = vmatprep.subr.mxu0 0.0
    %561 = vmatpush1.msra.mxu0 %v91
    %562 = vmatprep.subr.mxu0 0.0
    %563 = vmatpush1.msra.mxu0 %v92
    %564 = vmatprep.subr.mxu0 0.0
    %565 = vmatpush1.msra.mxu0 0.0
    %566 = vmatprep.subr.mxu0 0.0
    %567 = vmatpush1.msra.mxu0 0.0
    %568 = vmatprep.subr.mxu0 0.0
    %569 = vmatpush1.msra.mxu0 0.0
    %570 = vmatprep.subr.mxu0 0.0
    %571 = vmatpush1.msra.mxu0 0.0
    %572 = vmatprep.subr.mxu0 0.0
    %573 = vmatpush1.msra.mxu0 0.0
    %574 = vmatprep.subr.mxu0 0.0
    %575 = vmatpush1.msra.mxu0 0.0
    %576 = vmatprep.subr.mxu0 0.0
    %577 = vmatpush1.msra.mxu0 0.0
    %578 = vmatprep.subr.mxu0 0.0
    %579 = vmatpush1.msra.mxu0 0.0
    %580 = vmatprep.subr.mxu0 0.0
    %581 = vmatpush1.msra.mxu0 0.0
    %582 = vmatprep.subr.mxu0 0.0
    %583 = vmatpush1.msra.mxu0 0.0
    %584 = vmatprep.subr.mxu0 0.0
    %585 = vmatpush1.msra.mxu0 0.0
    %586 = vmatprep.subr.mxu0 0.0
    %587 = vmatpush1.msra.mxu0 0.0
    %588 = vmatprep.subr.mxu0 0.0
    %589 = vmatpush1.msra.mxu0 0.0
    %590 = vmatprep.subr.mxu0 0.0
    %591 = vmatpush1.msra.mxu0 0.0
    %592 = vmatprep.subr.mxu0 0.0
    %593 = vmatpush1.msra.mxu0 0.0
    %594 = vmatprep.subr.mxu0 0.0
    %595 = vmatpush1.msra.mxu0 0.0
    %596 = vmatprep.mubr.f32.mxu0 0.0
    %597 = vmatmul.mubr.f32.gmra.mrb[0].mxu0 %v461
    %v598 = vpop.f32.mrb[0].mxu0
    %v599 = vadd.f32 0.0, %v598
    %v600 = vpop.f32.mrb[0].mxu0
    %601 = vdwg.mxu0
    %v602 = vmul.f32 %v529, 0.001953125
    %v603 = vmul.f32 %v599, 0.001953125
    %v604 = vmul.f32 %v602, %v602
    %v605 = vsub.f32 %v603, %v604
    %v606 = vadd.f32 %v605, 1e-05
    %v607 = vrsqrt.pop %v606
    %v608 = vmul.f32 %v438, %v607
    %v609 = vmul.f32 %v602, %v608
    %v610 = vsub.f32 %v439, %v609
    %v612 = vlaneseq
    %v613 = vshrl.u32 %v612, 7
    %v614 = vsub.s32 0, %v613
    %v615 = vrot.slane %v608, %v614
    %v617 = vmul.f32 %v434, %v615
    %v618 = vmul.f32 %v435, %v615
    %v619 = vmul.f32 %v436, %v615
    %v620 = vmul.f32 %v437, %v615
    %v622 = vlaneseq
    %v623 = vshrl.u32 %v622, 7
    %v624 = vsub.s32 0, %v623
    %v625 = vrot.slane %v610, %v624
    %v627 = vadd.f32 %v617, %v625
    %v628 = vadd.f32 %v618, %v625
    %v629 = vadd.f32 %v619, %v625
    %v630 = vadd.f32 %v620, %v625
    %v631 = vmax.f32 %v627, 0.0
    %v632 = vmax.f32 %v628, 0.0
    %v633 = vmax.f32 %v629, 0.0
    %v634 = vmax.f32 %v630, 0.0
    %635 = vst [vmem:[#allocation2] sm:$0x1] 0.0
    %636 = vst [vmem:[#allocation2 + $0x18] sm:$0x1] 0.0
    %637 = vst [vmem:[#allocation2 + $0x11] sm:$0x1] 0.0
    %638 = vst [vmem:[#allocation2 + $0x29] sm:$0x1] 0.0
    %639 = vst [vmem:[#allocation2 + $0x1] sm:$0xff] %v631
    %640 = vst [vmem:[#allocation2 + $0x9] sm:$0xff] %v632
    %641 = vst [vmem:[#allocation2 + $0x19] sm:$0xff] %v633
    %642 = vst [vmem:[#allocation2 + $0x21] sm:$0xff] %v634
    %v643 = vld [vmem:[#allocation2] sm:$0xff]
    %v644 = vld [vmem:[#allocation2 + $0x8] sm:$0xff]
    %v645 = vld [vmem:[#allocation2 + $0x18] sm:$0xff]
    %v646 = vld [vmem:[#allocation2 + $0x20] sm:$0xff]
    %v647 = vld [vmem:[#allocation6] sm:$0xff]
    %v648 = vld [vmem:[#allocation6 + $0x8] sm:$0xff]
    %v649 = vld [vmem:[#allocation6 + $0x10] sm:$0xff]
    %v650 = vld [vmem:[#allocation6 + $0x18] sm:$0xff]
    %v651 = vld [vmem:[#allocation6 + $0x20] sm:$0xff]
    %v652 = vld [vmem:[#allocation6 + $0x28] sm:$0xff]
    %v653 = vld [vmem:[#allocation6 + $0x30] sm:$0xff]
    %v654 = vld [vmem:[#allocation6 + $0x38] sm:$0xff]
    %v655 = vld [vmem:[#allocation6 + $0x40] sm:$0xff]
    %v656 = vld [vmem:[#allocation6 + $0x48] sm:$0xff]
    %v657 = vld [vmem:[#allocation6 + $0x50] sm:$0xff]
    %v658 = vld [vmem:[#allocation6 + $0x58] sm:$0xff]
    %v659 = vld [vmem:[#allocation6 + $0x60] sm:$0xff]
    %v660 = vld [vmem:[#allocation6 + $0x68] sm:$0xff]
    %v661 = vld [vmem:[#allocation6 + $0x70] sm:$0xff]
    %v662 = vld [vmem:[#allocation6 + $0x78] sm:$0xff]
    %v663 = vld [vmem:[#allocation2 + $0x1] sm:$0xff]
    %v664 = vld [vmem:[#allocation2 + $0x9] sm:$0xff]
    %v665 = vld [vmem:[#allocation2 + $0x19] sm:$0xff]
    %v666 = vld [vmem:[#allocation2 + $0x21] sm:$0xff]
    %s667 = scalar_lea.vmem [#allocation6], 128
    %v668 = vld [vmem:[%s667] sm:$0xff]
    %v669 = vld [vmem:[%s667 + $0x8] sm:$0xff]
    %v670 = vld [vmem:[%s667 + $0x10] sm:$0xff]
    %v671 = vld [vmem:[%s667 + $0x18] sm:$0xff]
    %v672 = vld [vmem:[%s667 + $0x20] sm:$0xff]
    %v673 = vld [vmem:[%s667 + $0x28] sm:$0xff]
    %v674 = vld [vmem:[%s667 + $0x30] sm:$0xff]
    %v675 = vld [vmem:[%s667 + $0x38] sm:$0xff]
    %v676 = vld [vmem:[%s667 + $0x40] sm:$0xff]
    %v677 = vld [vmem:[%s667 + $0x48] sm:$0xff]
    %v678 = vld [vmem:[%s667 + $0x50] sm:$0xff]
    %v679 = vld [vmem:[%s667 + $0x58] sm:$0xff]
    %v680 = vld [vmem:[%s667 + $0x60] sm:$0xff]
    %v681 = vld [vmem:[%s667 + $0x68] sm:$0xff]
    %v682 = vld [vmem:[%s667 + $0x70] sm:$0xff]
    %v683 = vld [vmem:[%s667 + $0x78] sm:$0xff]
    %684 = vmatprep.subr.mxu0 0.0
    %685 = vmatpush1.msra.mxu0 %v668
    %686 = vmatprep.subr.mxu0 0.0
    %687 = vmatpush1.msra.mxu0 %v669
    %688 = vmatprep.subr.mxu0 0.0
    %689 = vmatpush1.msra.mxu0 %v670
    %690 = vmatprep.subr.mxu0 0.0
    %691 = vmatpush1.msra.mxu0 %v671
    %692 = vmatprep.subr.mxu0 0.0
    %693 = vmatpush1.msra.mxu0 %v672
    %694 = vmatprep.subr.mxu0 0.0
    %695 = vmatpush1.msra.mxu0 %v673
    %696 = vmatprep.subr.mxu0 0.0
    %697 = vmatpush1.msra.mxu0 %v674
    %698 = vmatprep.subr.mxu0 0.0
    %699 = vmatpush1.msra.mxu0 %v675
    %700 = vmatprep.subr.mxu0 0.0
    %701 = vmatpush1.msra.mxu0 %v676
    %702 = vmatprep.subr.mxu0 0.0
    %703 = vmatpush1.msra.mxu0 %v677
    %704 = vmatprep.subr.mxu0 0.0
    %705 = vmatpush1.msra.mxu0 %v678
    %706 = vmatprep.subr.mxu0 0.0
    %707 = vmatpush1.msra.mxu0 %v679
    %708 = vmatprep.subr.mxu0 0.0
    %709 = vmatpush1.msra.mxu0 %v680
    %710 = vmatprep.subr.mxu0 0.0
    %711 = vmatpush1.msra.mxu0 %v681
    %712 = vmatprep.subr.mxu0 0.0
    %713 = vmatpush1.msra.mxu0 %v682
    %714 = vmatprep.subr.mxu0 0.0
    %715 = vmatpush1.msra.mxu0 %v683
    %716 = vmatprep.subr.mxu0 0.0
    %717 = vmatpush1.msra.mxu0 0.0
    %718 = vmatprep.subr.mxu0 0.0
    %719 = vmatpush1.msra.mxu0 0.0
    %720 = vmatprep.subr.mxu0 0.0
    %721 = vmatpush1.msra.mxu0 0.0
    %722 = vmatprep.subr.mxu0 0.0
    %723 = vmatpush1.msra.mxu0 0.0
    %724 = vmatprep.subr.mxu0 0.0
    %725 = vmatpush1.msra.mxu0 0.0
    %726 = vmatprep.subr.mxu0 0.0
    %727 = vmatpush1.msra.mxu0 0.0
    %728 = vmatprep.subr.mxu0 0.0
    %729 = vmatpush1.msra.mxu0 0.0
    %730 = vmatprep.subr.mxu0 0.0
    %731 = vmatpush1.msra.mxu0 0.0
    %732 = vmatprep.subr.mxu0 0.0
    %733 = vmatpush1.msra.mxu0 0.0
    %734 = vmatprep.subr.mxu0 0.0
    %735 = vmatpush1.msra.mxu0 0.0
    %736 = vmatprep.subr.mxu0 0.0
    %737 = vmatpush1.msra.mxu0 0.0
    %738 = vmatprep.subr.mxu0 0.0
    %739 = vmatpush1.msra.mxu0 0.0
    %740 = vmatprep.subr.mxu0 0.0
    %741 = vmatpush1.msra.mxu0 0.0
    %742 = vmatprep.subr.mxu0 0.0
    %743 = vmatpush1.msra.mxu0 0.0
    %744 = vmatprep.subr.mxu0 0.0
    %745 = vmatpush1.msra.mxu0 0.0
    %746 = vmatprep.subr.mxu0 0.0
    %747 = vmatpush1.msra.mxu0 0.0
    %748 = vmatprep.mubr.f32.mxu0 0.0
    %749 = vmatmul.mubr.f32.gmra.mrb[0].mxu0 %v663
    %v750 = vpop.f32.mrb[0].mxu0
    %v751 = vadd.f32 0.0, %v750
    %v752 = vpop.f32.mrb[0].mxu0
    %753 = vmatprep.mubr.f32.mxu0 0.0
    %754 = vmatmul.mubr.f32.gmra.mrb[0].mxu0 %v664
    %v755 = vpop.f32.mrb[0].mxu0
    %v756 = vadd.f32 0.0, %v755
    %v757 = vpop.f32.mrb[0].mxu0
    %758 = vmatprep.mubr.f32.mxu0 0.0
    %759 = vmatmul.mubr.f32.gmra.mrb[0].mxu0 %v665
    %v760 = vpop.f32.mrb[0].mxu0
    %v761 = vadd.f32 0.0, %v760
    %v762 = vpop.f32.mrb[0].mxu0
    %763 = vmatprep.mubr.f32.mxu0 0.0
    %764 = vmatmul.mubr.f32.gmra.mrb[0].mxu0 %v666
    %v765 = vpop.f32.mrb[0].mxu0
    %v766 = vadd.f32 0.0, %v765
    %v767 = vpop.f32.mrb[0].mxu0
    %768 = vdwg.mxu0
    %769 = vmatprep.subr.mxu0 0.0
    %770 = vmatpush1.msra.mxu0 %v647
    %771 = vmatprep.subr.mxu0 0.0
    %772 = vmatpush1.msra.mxu0 %v648
    %773 = vmatprep.subr.mxu0 0.0
    %774 = vmatpush1.msra.mxu0 %v649
    %775 = vmatprep.subr.mxu0 0.0
    %776 = vmatpush1.msra.mxu0 %v650
    %777 = vmatprep.subr.mxu0 0.0
    %778 = vmatpush1.msra.mxu0 %v651
    %779 = vmatprep.subr.mxu0 0.0
    %780 = vmatpush1.msra.mxu0 %v652
    %781 = vmatprep.subr.mxu0 0.0
    %782 = vmatpush1.msra.mxu0 %v653
    %783 = vmatprep.subr.mxu0 0.0
    %784 = vmatpush1.msra.mxu0 %v654
    %785 = vmatprep.subr.mxu0 0.0
    %786 = vmatpush1.msra.mxu0 %v655
    %787 = vmatprep.subr.mxu0 0.0
    %788 = vmatpush1.msra.mxu0 %v656
    %789 = vmatprep.subr.mxu0 0.0
    %790 = vmatpush1.msra.mxu0 %v657
    %791 = vmatprep.subr.mxu0 0.0
    %792 = vmatpush1.msra.mxu0 %v658
    %793 = vmatprep.subr.mxu0 0.0
    %794 = vmatpush1.msra.mxu0 %v659
    %795 = vmatprep.subr.mxu0 0.0
    %796 = vmatpush1.msra.mxu0 %v660
    %797 = vmatprep.subr.mxu0 0.0
    %798 = vmatpush1.msra.mxu0 %v661
    %799 = vmatprep.subr.mxu0 0.0
    %800 = vmatpush1.msra.mxu0 %v662
    %801 = vmatprep.subr.mxu0 0.0
    %802 = vmatpush1.msra.mxu0 0.0
    %803 = vmatprep.subr.mxu0 0.0
    %804 = vmatpush1.msra.mxu0 0.0
    %805 = vmatprep.subr.mxu0 0.0
    %806 = vmatpush1.msra.mxu0 0.0
    %807 = vmatprep.subr.mxu0 0.0
    %808 = vmatpush1.msra.mxu0 0.0
    %809 = vmatprep.subr.mxu0 0.0
    %810 = vmatpush1.msra.mxu0 0.0
    %811 = vmatprep.subr.mxu0 0.0
    %812 = vmatpush1.msra.mxu0 0.0
    %813 = vmatprep.subr.mxu0 0.0
    %814 = vmatpush1.msra.mxu0 0.0
    %815 = vmatprep.subr.mxu0 0.0
    %816 = vmatpush1.msra.mxu0 0.0
    %817 = vmatprep.subr.mxu0 0.0
    %818 = vmatpush1.msra.mxu0 0.0
    %819 = vmatprep.subr.mxu0 0.0
    %820 = vmatpush1.msra.mxu0 0.0
    %821 = vmatprep.subr.mxu0 0.0
    %822 = vmatpush1.msra.mxu0 0.0
    %823 = vmatprep.subr.mxu0 0.0
    %824 = vmatpush1.msra.mxu0 0.0
    %825 = vmatprep.subr.mxu0 0.0
    %826 = vmatpush1.msra.mxu0 0.0
    %827 = vmatprep.subr.mxu0 0.0
    %828 = vmatpush1.msra.mxu0 0.0
    %829 = vmatprep.subr.mxu0 0.0
    %830 = vmatpush1.msra.mxu0 0.0
    %831 = vmatprep.subr.mxu0 0.0
    %832 = vmatpush1.msra.mxu0 0.0
    %833 = vmatprep.mubr.f32.mxu0 0.0
    %834 = vmatmul.mubr.f32.gmra.mrb[0].mxu0 %v643
    %v835 = vpop.f32.mrb[0].mxu0
    %v836 = vadd.f32 %v751, %v835
    %v837 = vpop.f32.mrb[0].mxu0
    %838 = vmatprep.mubr.f32.mxu0 0.0
    %839 = vmatmul.mubr.f32.gmra.mrb[0].mxu0 %v644
    %v840 = vpop.f32.mrb[0].mxu0
    %v841 = vadd.f32 %v756, %v840
    %v842 = vpop.f32.mrb[0].mxu0
    %843 = vmatprep.mubr.f32.mxu0 0.0
    %844 = vmatmul.mubr.f32.gmra.mrb[0].mxu0 %v645
    %v845 = vpop.f32.mrb[0].mxu0
    %v846 = vadd.f32 %v761, %v845
    %v847 = vpop.f32.mrb[0].mxu0
    %848 = vmatprep.mubr.f32.mxu0 0.0
    %849 = vmatmul.mubr.f32.gmra.mrb[0].mxu0 %v646
    %v850 = vpop.f32.mrb[0].mxu0
    %v851 = vadd.f32 %v766, %v850
    %v852 = vpop.f32.mrb[0].mxu0
    %853 = vdwg.mxu0
    %v854 = vld [vmem:[#allocation2 + $0x2] sm:$0xff]
    %v855 = vld [vmem:[#allocation2 + $0xa] sm:$0xff]
    %v856 = vld [vmem:[#allocation2 + $0x1a] sm:$0xff]
    %v857 = vld [vmem:[#allocation2 + $0x22] sm:$0xff]
    %s858 = scalar_lea.vmem [#allocation6], 256
    %v859 = vld [vmem:[%s858] sm:$0xff]
    %v860 = vld [vmem:[%s858 + $0x8] sm:$0xff]
    %v861 = vld [vmem:[%s858 + $0x10] sm:$0xff]
    %v862 = vld [vmem:[%s858 + $0x18] sm:$0xff]
    %v863 = vld [vmem:[%s858 + $0x20] sm:$0xff]
    %v864 = vld [vmem:[%s858 + $0x28] sm:$0xff]
    %v865 = vld [vmem:[%s858 + $0x30] sm:$0xff]
    %v866 = vld [vmem:[%s858 + $0x38] sm:$0xff]
    %v867 = vld [vmem:[%s858 + $0x40] sm:$0xff]
    %v868 = vld [vmem:[%s858 + $0x48] sm:$0xff]
    %v869 = vld [vmem:[%s858 + $0x50] sm:$0xff]
    %v870 = vld [vmem:[%s858 + $0x58] sm:$0xff]
    %v871 = vld [vmem:[%s858 + $0x60] sm:$0xff]
    %v872 = vld [vmem:[%s858 + $0x68] sm:$0xff]
    %v873 = vld [vmem:[%s858 + $0x70] sm:$0xff]
    %v874 = vld [vmem:[%s858 + $0x78] sm:$0xff]
    %875 = vmatprep.subr.mxu0 0.0
    %876 = vmatpush1.msra.mxu0 %v859
    %877 = vmatprep.subr.mxu0 0.0
    %878 = vmatpush1.msra.mxu0 %v860
    %879 = vmatprep.subr.mxu0 0.0
    %880 = vmatpush1.msra.mxu0 %v861
    %881 = vmatprep.subr.mxu0 0.0
    %882 = vmatpush1.msra.mxu0 %v862
    %883 = vmatprep.subr.mxu0 0.0
    %884 = vmatpush1.msra.mxu0 %v863
    %885 = vmatprep.subr.mxu0 0.0
    %886 = vmatpush1.msra.mxu0 %v864
    %887 = vmatprep.subr.mxu0 0.0
    %888 = vmatpush1.msra.mxu0 %v865
    %889 = vmatprep.subr.mxu0 0.0
    %890 = vmatpush1.msra.mxu0 %v866
    %891 = vmatprep.subr.mxu0 0.0
    %892 = vmatpush1.msra.mxu0 %v867
    %893 = vmatprep.subr.mxu0 0.0
    %894 = vmatpush1.msra.mxu0 %v868
    %895 = vmatprep.subr.mxu0 0.0
    %896 = vmatpush1.msra.mxu0 %v869
    %897 = vmatprep.subr.mxu0 0.0
    %898 = vmatpush1.msra.mxu0 %v870
    %899 = vmatprep.subr.mxu0 0.0
    %900 = vmatpush1.msra.mxu0 %v871
    %901 = vmatprep.subr.mxu0 0.0
    %902 = vmatpush1.msra.mxu0 %v872
    %903 = vmatprep.subr.mxu0 0.0
    %904 = vmatpush1.msra.mxu0 %v873
    %905 = vmatprep.subr.mxu0 0.0
    %906 = vmatpush1.msra.mxu0 %v874
    %907 = vmatprep.subr.mxu0 0.0
    %908 = vmatpush1.msra.mxu0 0.0
    %909 = vmatprep.subr.mxu0 0.0
    %910 = vmatpush1.msra.mxu0 0.0
    %911 = vmatprep.subr.mxu0 0.0
    %912 = vmatpush1.msra.mxu0 0.0
    %913 = vmatprep.subr.mxu0 0.0
    %914 = vmatpush1.msra.mxu0 0.0
    %915 = vmatprep.subr.mxu0 0.0
    %916 = vmatpush1.msra.mxu0 0.0
    %917 = vmatprep.subr.mxu0 0.0
    %918 = vmatpush1.msra.mxu0 0.0
    %919 = vmatprep.subr.mxu0 0.0
    %920 = vmatpush1.msra.mxu0 0.0
    %921 = vmatprep.subr.mxu0 0.0
    %922 = vmatpush1.msra.mxu0 0.0
    %923 = vmatprep.subr.mxu0 0.0
    %924 = vmatpush1.msra.mxu0 0.0
    %925 = vmatprep.subr.mxu0 0.0
    %926 = vmatpush1.msra.mxu0 0.0
    %927 = vmatprep.subr.mxu0 0.0
    %928 = vmatpush1.msra.mxu0 0.0
    %929 = vmatprep.subr.mxu0 0.0
    %930 = vmatpush1.msra.mxu0 0.0
    %931 = vmatprep.subr.mxu0 0.0
    %932 = vmatpush1.msra.mxu0 0.0
    %933 = vmatprep.subr.mxu0 0.0
    %934 = vmatpush1.msra.mxu0 0.0
    %935 = vmatprep.subr.mxu0 0.0
    %936 = vmatpush1.msra.mxu0 0.0
    %937 = vmatprep.subr.mxu0 0.0
    %938 = vmatpush1.msra.mxu0 0.0
    %939 = vmatprep.mubr.f32.mxu0 0.0
    %940 = vmatmul.mubr.f32.gmra.mrb[0].mxu0 %v854
    %v941 = vpop.f32.mrb[0].mxu0
    %v942 = vadd.f32 0.0, %v941
    %v943 = vpop.f32.mrb[0].mxu0
    %944 = vmatprep.mubr.f32.mxu0 0.0
    %945 = vmatmul.mubr.f32.gmra.mrb[0].mxu0 %v855
    %v946 = vpop.f32.mrb[0].mxu0
    %v947 = vadd.f32 0.0, %v946
    %v948 = vpop.f32.mrb[0].mxu0
    %949 = vmatprep.mubr.f32.mxu0 0.0
    %950 = vmatmul.mubr.f32.gmra.mrb[0].mxu0 %v856
    %v951 = vpop.f32.mrb[0].mxu0
    %v952 = vadd.f32 0.0, %v951
    %v953 = vpop.f32.mrb[0].mxu0
    %954 = vmatprep.mubr.f32.mxu0 0.0
    %955 = vmatmul.mubr.f32.gmra.mrb[0].mxu0 %v857
    %v956 = vpop.f32.mrb[0].mxu0
    %v957 = vadd.f32 0.0, %v956
    %v958 = vpop.f32.mrb[0].mxu0
    %959 = vdwg.mxu0
    %v960 = vadd.f32 %v836, %v942
    %v961 = vadd.f32 %v841, %v947
    %v962 = vadd.f32 %v846, %v952
    %v963 = vadd.f32 %v851, %v957
    %v964 = vld [vmem:[%s6] sm:$0x1]
    %v966 = vlaneseq
    %v967 = vshrl.u32 %v966, 7
    %v968 = vsub.s32 0, %v967
    %v969 = vrot.slane %v964, %v968
    %v971 = vadd.f32 %v960, %v969
    %v972 = vadd.f32 %v961, %v969
    %v973 = vadd.f32 %v962, %v969
    %v974 = vadd.f32 %v963, %v969
    %v975 = vld [vmem:[%s7] sm:$0x1]
    %v976 = vld [vmem:[%s8] sm:$0x1]
    %v977 = vadd.f32 %v971, %v972
    %v978 = vadd.f32 %v977, %v973
    %v979 = vadd.f32 %v978, %v974
    %v980 = vrot.slane %v979, 4
    %v981 = vadd.f32 %v979, %v980
    %v982 = vrot.slane %v981, 2
    %v983 = vadd.f32 %v981, %v982
    %v984 = vrot.slane %v983, 1
    %v985 = vadd.f32 %v983, %v984
    %v986 = vmul.f32 %v971, %v971
    %v987 = vmul.f32 %v972, %v972
    %v988 = vmul.f32 %v973, %v973
    %v989 = vmul.f32 %v974, %v974
    %v990 = vadd.f32 %v986, %v987
    %v991 = vadd.f32 %v990, %v988
    %v992 = vadd.f32 %v991, %v989
    %v993 = vrot.slane %v992, 4
    %v994 = vadd.f32 %v992, %v993
    %v995 = vrot.slane %v994, 2
    %v996 = vadd.f32 %v994, %v995
    %v997 = vrot.slane %v996, 1
    %v998 = vadd.f32 %v996, %v997
    %999 = vmatprep.subr.mxu0 0.0
    %1000 = vmatpush1.msra.mxu0 %v77
    %1001 = vmatprep.subr.mxu0 0.0
    %1002 = vmatpush1.msra.mxu0 %v78
    %1003 = vmatprep.subr.mxu0 0.0
    %1004 = vmatpush1.msra.mxu0 %v79
    %1005 = vmatprep.subr.mxu0 0.0
    %1006 = vmatpush1.msra.mxu0 %v80
    %1007 = vmatprep.subr.mxu0 0.0
    %1008 = vmatpush1.msra.mxu0 %v81
    %1009 = vmatprep.subr.mxu0 0.0
    %1010 = vmatpush1.msra.mxu0 %v82
    %1011 = vmatprep.subr.mxu0 0.0
    %1012 = vmatpush1.msra.mxu0 %v83
    %1013 = vmatprep.subr.mxu0 0.0
    %1014 = vmatpush1.msra.mxu0 %v84
    %1015 = vmatprep.subr.mxu0 0.0
    %1016 = vmatpush1.msra.mxu0 %v85
    %1017 = vmatprep.subr.mxu0 0.0
    %1018 = vmatpush1.msra.mxu0 %v86
    %1019 = vmatprep.subr.mxu0 0.0
    %1020 = vmatpush1.msra.mxu0 %v87
    %1021 = vmatprep.subr.mxu0 0.0
    %1022 = vmatpush1.msra.mxu0 %v88
    %1023 = vmatprep.subr.mxu0 0.0
    %1024 = vmatpush1.msra.mxu0 %v89
    %1025 = vmatprep.subr.mxu0 0.0
    %1026 = vmatpush1.msra.mxu0 %v90
    %1027 = vmatprep.subr.mxu0 0.0
    %1028 = vmatpush1.msra.mxu0 %v91
    %1029 = vmatprep.subr.mxu0 0.0
    %1030 = vmatpush1.msra.mxu0 %v92
    %1031 = vmatprep.subr.mxu0 0.0
    %1032 = vmatpush1.msra.mxu0 0.0
    %1033 = vmatprep.subr.mxu0 0.0
    %1034 = vmatpush1.msra.mxu0 0.0
    %1035 = vmatprep.subr.mxu0 0.0
    %1036 = vmatpush1.msra.mxu0 0.0
    %1037 = vmatprep.subr.mxu0 0.0
    %1038 = vmatpush1.msra.mxu0 0.0
    %1039 = vmatprep.subr.mxu0 0.0
    %1040 = vmatpush1.msra.mxu0 0.0
    %1041 = vmatprep.subr.mxu0 0.0
    %1042 = vmatpush1.msra.mxu0 0.0
    %1043 = vmatprep.subr.mxu0 0.0
    %1044 = vmatpush1.msra.mxu0 0.0
    %1045 = vmatprep.subr.mxu0 0.0
    %1046 = vmatpush1.msra.mxu0 0.0
    %1047 = vmatprep.subr.mxu0 0.0
    %1048 = vmatpush1.msra.mxu0 0.0
    %1049 = vmatprep.subr.mxu0 0.0
    %1050 = vmatpush1.msra.mxu0 0.0
    %1051 = vmatprep.subr.mxu0 0.0
    %1052 = vmatpush1.msra.mxu0 0.0
    %1053 = vmatprep.subr.mxu0 0.0
    %1054 = vmatpush1.msra.mxu0 0.0
    %1055 = vmatprep.subr.mxu0 0.0
    %1056 = vmatpush1.msra.mxu0 0.0
    %1057 = vmatprep.subr.mxu0 0.0
    %1058 = vmatpush1.msra.mxu0 0.0
    %1059 = vmatprep.subr.mxu0 0.0
    %1060 = vmatpush1.msra.mxu0 0.0
    %1061 = vmatprep.subr.mxu0 0.0
    %1062 = vmatpush1.msra.mxu0 0.0
    %1063 = vmatprep.mubr.f32.mxu0 0.0
    %1064 = vmatmul.mubr.f32.gmra.mrb[0].mxu0 %v985
    %v1065 = vpop.f32.mrb[0].mxu0
    %v1066 = vadd.f32 0.0, %v1065
    %v1067 = vpop.f32.mrb[0].mxu0
    %1068 = vdwg.mxu0
    %1069 = vmatprep.subr.mxu0 0.0
    %1070 = vmatpush1.msra.mxu0 %v77
    %1071 = vmatprep.subr.mxu0 0.0
    %1072 = vmatpush1.msra.mxu0 %v78
    %1073 = vmatprep.subr.mxu0 0.0
    %1074 = vmatpush1.msra.mxu0 %v79
    %1075 = vmatprep.subr.mxu0 0.0
    %1076 = vmatpush1.msra.mxu0 %v80
    %1077 = vmatprep.subr.mxu0 0.0
    %1078 = vmatpush1.msra.mxu0 %v81
    %1079 = vmatprep.subr.mxu0 0.0
    %1080 = vmatpush1.msra.mxu0 %v82
    %1081 = vmatprep.subr.mxu0 0.0
    %1082 = vmatpush1.msra.mxu0 %v83
    %1083 = vmatprep.subr.mxu0 0.0
    %1084 = vmatpush1.msra.mxu0 %v84
    %1085 = vmatprep.subr.mxu0 0.0
    %1086 = vmatpush1.msra.mxu0 %v85
    %1087 = vmatprep.subr.mxu0 0.0
    %1088 = vmatpush1.msra.mxu0 %v86
    %1089 = vmatprep.subr.mxu0 0.0
    %1090 = vmatpush1.msra.mxu0 %v87
    %1091 = vmatprep.subr.mxu0 0.0
    %1092 = vmatpush1.msra.mxu0 %v88
    %1093 = vmatprep.subr.mxu0 0.0
    %1094 = vmatpush1.msra.mxu0 %v89
    %1095 = vmatprep.subr.mxu0 0.0
    %1096 = vmatpush1.msra.mxu0 %v90
    %1097 = vmatprep.subr.mxu0 0.0
    %1098 = vmatpush1.msra.mxu0 %v91
    %1099 = vmatprep.subr.mxu0 0.0
    %1100 = vmatpush1.msra.mxu0 %v92
    %1101 = vmatprep.subr.mxu0 0.0
    %1102 = vmatpush1.msra.mxu0 0.0
    %1103 = vmatprep.subr.mxu0 0.0
    %1104 = vmatpush1.msra.mxu0 0.0
    %1105 = vmatprep.subr.mxu0 0.0
    %1106 = vmatpush1.msra.mxu0 0.0
    %1107 = vmatprep.subr.mxu0 0.0
    %1108 = vmatpush1.msra.mxu0 0.0
    %1109 = vmatprep.subr.mxu0 0.0
    %1110 = vmatpush1.msra.mxu0 0.0
    %1111 = vmatprep.subr.mxu0 0.0
    %1112 = vmatpush1.msra.mxu0 0.0
    %1113 = vmatprep.subr.mxu0 0.0
    %1114 = vmatpush1.msra.mxu0 0.0
    %1115 = vmatprep.subr.mxu0 0.0
    %1116 = vmatpush1.msra.mxu0 0.0
    %1117 = vmatprep.subr.mxu0 0.0
    %1118 = vmatpush1.msra.mxu0 0.0
    %1119 = vmatprep.subr.mxu0 0.0
    %1120 = vmatpush1.msra.mxu0 0.0
    %1121 = vmatprep.subr.mxu0 0.0
    %1122 = vmatpush1.msra.mxu0 0.0
    %1123 = vmatprep.subr.mxu0 0.0
    %1124 = vmatpush1.msra.mxu0 0.0
    %1125 = vmatprep.subr.mxu0 0.0
    %1126 = vmatpush1.msra.mxu0 0.0
    %1127 = vmatprep.subr.mxu0 0.0
    %1128 = vmatpush1.msra.mxu0 0.0
    %1129 = vmatprep.subr.mxu0 0.0
    %1130 = vmatpush1.msra.mxu0 0.0
    %1131 = vmatprep.subr.mxu0 0.0
    %1132 = vmatpush1.msra.mxu0 0.0
    %1133 = vmatprep.mubr.f32.mxu0 0.0
    %1134 = vmatmul.mubr.f32.gmra.mrb[0].mxu0 %v998
    %v1135 = vpop.f32.mrb[0].mxu0
    %v1136 = vadd.f32 0.0, %v1135
    %v1137 = vpop.f32.mrb[0].mxu0
    %1138 = vdwg.mxu0
    %v1139 = vmul.f32 %v1066, 0.001953125
    %v1140 = vmul.f32 %v1136, 0.001953125
    %v1141 = vmul.f32 %v1139, %v1139
    %v1142 = vsub.f32 %v1140, %v1141
    %v1143 = vadd.f32 %v1142, 1e-05
    %v1144 = vrsqrt.pop %v1143
    %v1145 = vmul.f32 %v975, %v1144
    %v1146 = vmul.f32 %v1139, %v1145
    %v1147 = vsub.f32 %v976, %v1146
    %v1149 = vlaneseq
    %v1150 = vshrl.u32 %v1149, 7
    %v1151 = vsub.s32 0, %v1150
    %v1152 = vrot.slane %v1145, %v1151
    %v1154 = vmul.f32 %v971, %v1152
    %v1155 = vmul.f32 %v972, %v1152
    %v1156 = vmul.f32 %v973, %v1152
    %v1157 = vmul.f32 %v974, %v1152
    %v1159 = vlaneseq
    %v1160 = vshrl.u32 %v1159, 7
    %v1161 = vsub.s32 0, %v1160
    %v1162 = vrot.slane %v1147, %v1161
    %v1164 = vadd.f32 %v1154, %v1162
    %v1165 = vadd.f32 %v1155, %v1162
    %v1166 = vadd.f32 %v1156, %v1162
    %v1167 = vadd.f32 %v1157, %v1162
    %v1168 = vmax.f32 %v1164, 0.0
    %v1169 = vmax.f32 %v1165, 0.0
    %v1170 = vmax.f32 %v1166, 0.0
    %v1171 = vmax.f32 %v1167, 0.0
    %1172 = vst [vmem:[#allocation9] sm:$0xff] %v1168
    %1173 = vst [vmem:[#allocation9 + $0x8] sm:$0xff] %v1169
    %1174 = vst [vmem:[#allocation9 + $0x10] sm:$0xff] %v1170
    %1175 = vst [vmem:[#allocation9 + $0x18] sm:$0xff] %v1171
    // Predicated region
    $region54: #{tpu_custom_call.1} parent=1 // pred_check
      _
    $region55: #{tpu_custom_call.1} parent=1 // pred_check_branch
      %1177 = sbr.rel (0) target = $region57
    $region56: #{tpu_custom_call.1} parent=1 // pred_region
      %s1179 = ssub.s32 512, 512
      %1180 = vsyncadd [#allocation5], %s1179
      %s1181 = sshll.u32 [#allocation9], 4
      %s1182 = int_to_ptr.vmem [resolvable:$true] %s1181
      %1187 = dma.vmem_to_hbm [thread:$0]  %s1182, 512, %s10, [#allocation5], 128, 128, 8
    $region57: #{tpu_custom_call.1} parent=1 // pred_fallthru
      _
    // Predicated region
    $region58: #{tpu_custom_call.1} parent=1 // pred_check
      _
    $region59: #{tpu_custom_call.1} parent=1 // pred_check_branch
      %1189 = sbr.rel (0) target = $region61
    $region60: #{tpu_custom_call.1} parent=1 // pred_region
      %1190 = dma.done [#allocation5], 512
    $region61: #{tpu_custom_call.1} parent=1 // pred_fallthru
      _
    %1191 = vsyncpa [#allocation4], 1
    %1192 = vsyncpa [#allocation7], 1
    %1193 = vsyncpa [#allocation5], 1

</llo_original>
